<compile_context>
chip_gen: v5e
topology: v5e:2x2
jax: 0.10.0
libtpu: 0.0.40
codegen_flags: <defaults>
</compile_context>

<pallas_src>
import functools

import numpy as np
import jax
import jax.numpy as jnp
from jax.experimental import pallas as pl
from jax.experimental.pallas import tpu as pltpu

EPS = 1e-5


def _round_up(v, m):
    return (v + m - 1) // m * m


def _bilinear_matrix(out_size: int, in_size: int) -> np.ndarray:
    """Interpolation matrix matching F.interpolate(mode='bilinear', align_corners=False)."""
    scale = in_size / out_size
    i = np.arange(out_size)
    src = (i + 0.5) * scale - 0.5
    src = np.maximum(src, 0.0)
    x0 = np.floor(src).astype(np.int64)
    x1 = np.minimum(x0 + 1, in_size - 1)
    frac = (src - x0).astype(np.float32)
    A = np.zeros((out_size, in_size), np.float32)
    A[i, x0] += 1.0 - frac
    A[i, x1] += frac
    return A


def _deconv_stats_kernel(xp_ref, w_ref, b_ref, mask_ref, y_ref, sum_ref, ssq_ref,
                         *, shifts, p_lanes):
    """Pass 1: deconv (shifted in-VMEM windows) + bias + ReLU + BN partial sums.

    xp_ref  : (1, C_in, P_in)    bf16  flattened zero-padded input (pad grid, lane-padded)
    w_ref   : (K*K, C_out, C_in) bf16  spatially flipped deconv weights, tap-major
    b_ref   : (C_out, 1)         f32   deconv bias
    mask_ref: (1, P_lanes)       f32   1.0 at valid output positions of the pad grid
    y_ref   : (1, C_out, P_lanes) f32  pre-norm activations (pad-grid layout)
    sum_ref, ssq_ref: (1, C_out, 1) f32  per-batch BN partials (valid positions only)
    """
    xp = xp_ref[0]                                           # (C_in, P_in) bf16

    # The K*K windows are plain lane-offset slices of the flattened pad grid, built in
    # VMEM (no HBM im2col).  With C_in=4 (< one sublane tile) we accumulate K*K wide-N
    # matmuls in f32; for larger C_in these windows would be stacked along the
    # contraction axis into a single (K*K*C_in)-deep MXU matmul.
    s0 = shifts[0]
    acc = jnp.dot(w_ref[0], xp[:, s0:s0 + p_lanes],
                  preferred_element_type=jnp.float32)        # (C_out, P_lanes) f32
    for t in range(1, len(shifts)):
        s = shifts[t]
        acc = acc + jnp.dot(w_ref[t], xp[:, s:s + p_lanes],
                            preferred_element_type=jnp.float32)

    y = jnp.maximum(acc + b_ref[...], 0.0)                   # bias broadcast over lanes
    y_ref[0] = y

    ym = y * mask_ref[...]                                   # drop pad-grid slop from stats
    sum_ref[0] = jnp.sum(ym, axis=1, keepdims=True)          # (C_out, 1)
    ssq_ref[0] = jnp.sum(ym * ym, axis=1, keepdims=True)


def _norm_identity_kernel(y_ref, up_ref, wp_ref, scale_ref, shift_ref, out_ref):
    """Pass 2: fused BN affine + 1x1 projection of the upsampled input + residual add.

    y_ref    : (1, C_out, P_lanes) f32
    up_ref   : (1, C_in,  P_lanes) bf16  bilinearly upsampled input on the pad grid
    wp_ref   : (C_out, C_in)       bf16  1x1 projection weight
    scale_ref, shift_ref: (C_out, 1) f32  fused BN affine (projection bias folded in)
    out_ref  : (1, C_out, P_lanes) f32
    """
    ident = jnp.dot(wp_ref[...], up_ref[0], preferred_element_type=jnp.float32)
    out_ref[0] = scale_ref[...] * y_ref[0] + ident + shift_ref[...]


def residual_up_block(x, params, kernel_size=3, stride=1, padding=0):
    """Pallas version of ResidualUpBlock.forward for the module defaults (stride=1, pad=0)."""
    assert stride == 1 and padding == 0
    B, C_in, H, W = x.shape
    K = kernel_size
    C_out = params["w_deconv"].shape[1]
    H_out = (H - 1) * stride - 2 * padding + (K - 1) + 1
    W_out = (W - 1) * stride - 2 * padding + (K - 1) + 1
    H_pad, W_pad = H + 2 * (K - 1), W + 2 * (K - 1)
    P_grid = H_pad * W_pad                            # flattened pad grid the kernels use
    P_lanes = _round_up(P_grid, 128)                  # lane-dense width (multiple of 128)
    shifts = tuple(kh * W_pad + kw for kh in range(K) for kw in range(K))
    P_in = _round_up(P_lanes + shifts[-1], 128)       # input width incl. max window shift

    xf = x.astype(jnp.float32)

    # ---- pass-1 inputs ----------------------------------------------------------------
    # ConvTranspose2d(stride=1,pad=0) == correlation of the (K-1)-zero-padded input with
    # the spatially flipped kernel; only the padded input (not a 9x im2col) goes to HBM.
    x_sp = jnp.pad(xf, ((0, 0), (0, 0), (K - 1, K - 1), (K - 1, K - 1)))
    xp_flat = jnp.pad(x_sp.reshape(B, C_in, P_grid),
                      ((0, 0), (0, 0), (0, P_in - P_grid))).astype(jnp.bfloat16)

    wd = params["w_deconv"][:, :, ::-1, ::-1]                                  # (C_in,C_out,K,K)
    w_dec = jnp.transpose(wd, (2, 3, 1, 0)).reshape(K * K, C_out, C_in).astype(jnp.bfloat16)
    b_dec = params["b_deconv"].reshape(C_out, 1).astype(jnp.float32)

    q = np.arange(P_lanes)
    mask = jnp.asarray((((q // W_pad) < H_out) & ((q % W_pad) < W_out))
                       .astype(np.float32).reshape(1, P_lanes))

    cparams = pltpu.CompilerParams(dimension_semantics=("parallel",),
                                   vmem_limit_bytes=32 * 1024 * 1024)

    kernel1 = functools.partial(_deconv_stats_kernel, shifts=shifts, p_lanes=P_lanes)
    y, psum, pssq = pl.pallas_call(
        kernel1,
        grid=(B,),
        in_specs=[
            pl.BlockSpec((1, C_in, P_in), lambda b: (b, 0, 0)),
            pl.BlockSpec((K * K, C_out, C_in), lambda b: (0, 0, 0)),
            pl.BlockSpec((C_out, 1), lambda b: (0, 0)),
            pl.BlockSpec((1, P_lanes), lambda b: (0, 0)),
        ],
        out_specs=[
            pl.BlockSpec((1, C_out, P_lanes), lambda b: (b, 0, 0)),
            pl.BlockSpec((1, C_out, 1), lambda b: (b, 0, 0)),
            pl.BlockSpec((1, C_out, 1), lambda b: (b, 0, 0)),
        ],
        out_shape=(
            jax.ShapeDtypeStruct((B, C_out, P_lanes), jnp.float32),
            jax.ShapeDtypeStruct((B, C_out, 1), jnp.float32),
            jax.ShapeDtypeStruct((B, C_out, 1), jnp.float32),
        ),
        compiler_params=cparams,
    )(xp_flat, w_dec, b_dec, mask)

    # ---- BatchNorm2d (training-mode, biased batch stats) -> fused per-channel affine ---
    n = float(B * H_out * W_out)
    mean = jnp.sum(psum, axis=0)[:, 0] / n                                     # (C_out,)
    ex2 = jnp.sum(pssq, axis=0)[:, 0] / n
    var = jnp.maximum(ex2 - mean * mean, 0.0)                                  # one-pass var
    ginv = params["gamma"] * jax.lax.rsqrt(var + EPS)
    scale = ginv.reshape(C_out, 1).astype(jnp.float32)
    shift = (params["beta"] - mean * ginv + params["b_project"]).reshape(C_out, 1).astype(jnp.float32)

    # ---- identity path: separable bilinear upsample (two tiny matmuls, no kron) --------
    # TODO(synk): the two (out,in) interpolation matmuls stay in XLA glue; doing them
    # in-kernel would need (H,W)->flat-P relayouts that cost more than they save here.
    Ah = jnp.asarray(_bilinear_matrix(H_out, H))
    Aw = jnp.asarray(_bilinear_matrix(W_out, W))
    up = jnp.einsum("ph,bchw->bcpw", Ah, xf)
    up = jnp.einsum("qw,bcpw->bcpq", Aw, up)                                   # (B,C_in,H_out,W_out)
    up = jnp.pad(up, ((0, 0), (0, 0), (0, H_pad - H_out), (0, W_pad - W_out)))
    up = jnp.pad(up.reshape(B, C_in, P_grid),
                 ((0, 0), (0, 0), (0, P_lanes - P_grid))).astype(jnp.bfloat16)

    w_proj = params["w_project"][:, :, 0, 0].astype(jnp.bfloat16)              # (C_out, C_in)

    out_pg = pl.pallas_call(
        _norm_identity_kernel,
        grid=(B,),
        in_specs=[
            pl.BlockSpec((1, C_out, P_lanes), lambda b: (b, 0, 0)),
            pl.BlockSpec((1, C_in, P_lanes), lambda b: (b, 0, 0)),
            pl.BlockSpec((C_out, C_in), lambda b: (0, 0)),
            pl.BlockSpec((C_out, 1), lambda b: (0, 0)),
            pl.BlockSpec((C_out, 1), lambda b: (0, 0)),
        ],
        out_specs=pl.BlockSpec((1, C_out, P_lanes), lambda b: (b, 0, 0)),
        out_shape=jax.ShapeDtypeStruct((B, C_out, P_lanes), jnp.float32),
        compiler_params=cparams,
    )(y, up, w_proj, scale, shift)

    # pad-grid -> NCHW: already channel-major, just drop the padding.
    out = out_pg[:, :, :P_grid].reshape(B, C_out, H_pad, W_pad)[:, :, :H_out, :W_out]
    return out


def reference_forward(x, params, kernel_size=3):
    """Pure-JAX f32 reference of the same forward pass (for correctness checking)."""
    K = kernel_size
    B, C_in, H, W = x.shape
    C_out = params["w_deconv"].shape[1]
    H_out, W_out = H + K - 1, W + K - 1
    xf = x.astype(jnp.float32)
    xpad = jnp.pad(xf, ((0, 0), (0, 0), (K - 1, K - 1), (K - 1, K - 1)))
    wd = params["w_deconv"][:, :, ::-1, ::-1]
    y = jnp.zeros((B, C_out, H_out, W_out), jnp.float32)
    for kh in range(K):
        for kw in range(K):
            y = y + jnp.einsum("bchw,co->bohw",
                               xpad[:, :, kh:kh + H_out, kw:kw + W_out],
                               wd[:, :, kh, kw])
    y = jnp.maximum(y + params["b_deconv"][None, :, None, None], 0.0)
    mean = y.mean(axis=(0, 2, 3))
    var = ((y - mean[None, :, None, None]) ** 2).mean(axis=(0, 2, 3))
    y = ((y - mean[None, :, None, None])
         * (jax.lax.rsqrt(var + EPS) * params["gamma"])[None, :, None, None]
         + params["beta"][None, :, None, None])
    Ah = jnp.asarray(_bilinear_matrix(H_out, H))
    Aw = jnp.asarray(_bilinear_matrix(W_out, W))
    up = jnp.einsum("ph,bchw->bcpw", Ah, xf)
    up = jnp.einsum("qw,bcpw->bcpq", Aw, up)
    ident = (jnp.einsum("oc,bcpq->bopq", params["w_project"][:, :, 0, 0], up)
             + params["b_project"][None, :, None, None])
    return y + ident


if __name__ == "__main__":
    B, C_in, C_out, H, W, K = 2, 4, 8, 16, 16, 3
    key = jax.random.PRNGKey(0)
    k1, k2, k3, k4, kx = jax.random.split(key, 5)
    params = {
        # ConvTranspose2d weight: (in_channels, out_channels, kH, kW)
        "w_deconv": 0.1 * jax.random.normal(k1, (C_in, C_out, K, K), jnp.float32),
        "b_deconv": 0.1 * jax.random.normal(k2, (C_out,), jnp.float32),
        # Conv2d(1x1) weight: (out_channels, in_channels, 1, 1)
        "w_project": 0.1 * jax.random.normal(k3, (C_out, C_in, 1, 1), jnp.float32),
        "b_project": 0.1 * jax.random.normal(k4, (C_out,), jnp.float32),
        # BatchNorm2d default init
        "gamma": jnp.ones((C_out,), jnp.float32),
        "beta": jnp.zeros((C_out,), jnp.float32),
    }
    x = jax.random.normal(kx, (B, C_in, H, W), jnp.float32)   # NCHW input

    out = jax.block_until_ready(residual_up_block(x, params, kernel_size=K))
    ref = jax.block_until_ready(reference_forward(x, params, kernel_size=K))
    assert out.shape == (B, C_out, H + K - 1, W + K - 1)
    # Slightly looser than the all-f32 version: bf16 matmul operands + one-pass variance.
    np.testing.assert_allclose(np.asarray(out), np.asarray(ref), rtol=3e-2, atol=3e-2)
    print("KERNEL_OK")
</pallas_src>

<mosaic_0001>
module attributes {stable_mosaic.version = 11 : i64} {
  func.func @_deconv_stats_kernel(%arg0: i32, %arg1: memref<1x4x640xbf16, #tpu.memory_space<vmem>>, %arg2: memref<9x8x4xbf16, #tpu.memory_space<vmem>>, %arg3: memref<8x1xf32, #tpu.memory_space<vmem>>, %arg4: memref<1x512xf32, #tpu.memory_space<vmem>>, %arg5: memref<1x8x512xf32, #tpu.memory_space<vmem>>, %arg6: memref<1x8x1xf32, #tpu.memory_space<vmem>>, %arg7: memref<1x8x1xf32, #tpu.memory_space<vmem>>) attributes {dimension_semantics = [#tpu.dimension_semantics<parallel>], iteration_bounds = array<i64: 2>, scalar_prefetch = 0 : i64, scratch_operands = 0 : i64, tpu.core_type = #tpu.core_type<tc>, window_params = [{transform_indices = @transform_0, window_bounds = array<i64: 1, 4, 640>}, {pipeline_mode = #tpu.pipeline_mode<synchronous>, transform_indices = @transform_1, window_bounds = array<i64: 9, 8, 4>}, {pipeline_mode = #tpu.pipeline_mode<synchronous>, transform_indices = @transform_2, window_bounds = array<i64: 8, 1>}, {pipeline_mode = #tpu.pipeline_mode<synchronous>, transform_indices = @transform_3, window_bounds = array<i64: 1, 512>}, {transform_indices = @transform_4, window_bounds = array<i64: 1, 8, 512>}, {transform_indices = @transform_5, window_bounds = array<i64: 1, 8, 1>}, {transform_indices = @transform_6, window_bounds = array<i64: 1, 8, 1>}]} {
    %c0 = arith.constant 0 : index
    %c0_0 = arith.constant 0 : index
    %c0_1 = arith.constant 0 : index
    %0 = vector.load %arg1[%c0, %c0_0, %c0_1] : memref<1x4x640xbf16, #tpu.memory_space<vmem>>, vector<1x4x640xbf16>
    %1 = vector.shape_cast %0 : vector<1x4x640xbf16> to vector<4x640xbf16>
    %c0_2 = arith.constant 0 : index
    %c0_3 = arith.constant 0 : index
    %c0_4 = arith.constant 0 : index
    %2 = vector.load %arg2[%c0_2, %c0_3, %c0_4] : memref<9x8x4xbf16, #tpu.memory_space<vmem>>, vector<1x8x4xbf16>
    %3 = vector.shape_cast %2 : vector<1x8x4xbf16> to vector<8x4xbf16>
    %4 = vector.extract_strided_slice %1 {offsets = [0, 0], sizes = [4, 512], strides = [1, 1]} : vector<4x640xbf16> to vector<4x512xbf16>
    %cst = arith.constant dense<0.000000e+00> : vector<8x512xf32>
    %5 = tpu.matmul %3, %4, %cst {dimension_numbers = #tpu.dot_dimension_numbers<[1], [0], [0], [1], [0, 0, 1, 1], [], []>} : vector<8x4xbf16>, vector<4x512xbf16>, vector<8x512xf32> -> vector<8x512xf32>
    %c1 = arith.constant 1 : index
    %c0_5 = arith.constant 0 : index
    %c0_6 = arith.constant 0 : index
    %6 = vector.load %arg2[%c1, %c0_5, %c0_6] : memref<9x8x4xbf16, #tpu.memory_space<vmem>>, vector<1x8x4xbf16>
    %7 = vector.shape_cast %6 : vector<1x8x4xbf16> to vector<8x4xbf16>
    %8 = vector.extract_strided_slice %1 {offsets = [0, 1], sizes = [4, 512], strides = [1, 1]} : vector<4x640xbf16> to vector<4x512xbf16>
    %cst_7 = arith.constant dense<0.000000e+00> : vector<8x512xf32>
    %9 = tpu.matmul %7, %8, %cst_7 {dimension_numbers = #tpu.dot_dimension_numbers<[1], [0], [0], [1], [0, 0, 1, 1], [], []>} : vector<8x4xbf16>, vector<4x512xbf16>, vector<8x512xf32> -> vector<8x512xf32>
    %10 = arith.addf %5, %9 : vector<8x512xf32>
    %c2 = arith.constant 2 : index
    %c0_8 = arith.constant 0 : index
    %c0_9 = arith.constant 0 : index
    %11 = vector.load %arg2[%c2, %c0_8, %c0_9] : memref<9x8x4xbf16, #tpu.memory_space<vmem>>, vector<1x8x4xbf16>
    %12 = vector.shape_cast %11 : vector<1x8x4xbf16> to vector<8x4xbf16>
    %13 = vector.extract_strided_slice %1 {offsets = [0, 2], sizes = [4, 512], strides = [1, 1]} : vector<4x640xbf16> to vector<4x512xbf16>
    %cst_10 = arith.constant dense<0.000000e+00> : vector<8x512xf32>
    %14 = tpu.matmul %12, %13, %cst_10 {dimension_numbers = #tpu.dot_dimension_numbers<[1], [0], [0], [1], [0, 0, 1, 1], [], []>} : vector<8x4xbf16>, vector<4x512xbf16>, vector<8x512xf32> -> vector<8x512xf32>
    %15 = arith.addf %10, %14 : vector<8x512xf32>
    %c3 = arith.constant 3 : index
    %c0_11 = arith.constant 0 : index
    %c0_12 = arith.constant 0 : index
    %16 = vector.load %arg2[%c3, %c0_11, %c0_12] : memref<9x8x4xbf16, #tpu.memory_space<vmem>>, vector<1x8x4xbf16>
    %17 = vector.shape_cast %16 : vector<1x8x4xbf16> to vector<8x4xbf16>
    %18 = vector.extract_strided_slice %1 {offsets = [0, 20], sizes = [4, 512], strides = [1, 1]} : vector<4x640xbf16> to vector<4x512xbf16>
    %cst_13 = arith.constant dense<0.000000e+00> : vector<8x512xf32>
    %19 = tpu.matmul %17, %18, %cst_13 {dimension_numbers = #tpu.dot_dimension_numbers<[1], [0], [0], [1], [0, 0, 1, 1], [], []>} : vector<8x4xbf16>, vector<4x512xbf16>, vector<8x512xf32> -> vector<8x512xf32>
    %20 = arith.addf %15, %19 : vector<8x512xf32>
    %c4 = arith.constant 4 : index
    %c0_14 = arith.constant 0 : index
    %c0_15 = arith.constant 0 : index
    %21 = vector.load %arg2[%c4, %c0_14, %c0_15] : memref<9x8x4xbf16, #tpu.memory_space<vmem>>, vector<1x8x4xbf16>
    %22 = vector.shape_cast %21 : vector<1x8x4xbf16> to vector<8x4xbf16>
    %23 = vector.extract_strided_slice %1 {offsets = [0, 21], sizes = [4, 512], strides = [1, 1]} : vector<4x640xbf16> to vector<4x512xbf16>
    %cst_16 = arith.constant dense<0.000000e+00> : vector<8x512xf32>
    %24 = tpu.matmul %22, %23, %cst_16 {dimension_numbers = #tpu.dot_dimension_numbers<[1], [0], [0], [1], [0, 0, 1, 1], [], []>} : vector<8x4xbf16>, vector<4x512xbf16>, vector<8x512xf32> -> vector<8x512xf32>
    %25 = arith.addf %20, %24 : vector<8x512xf32>
    %c5 = arith.constant 5 : index
    %c0_17 = arith.constant 0 : index
    %c0_18 = arith.constant 0 : index
    %26 = vector.load %arg2[%c5, %c0_17, %c0_18] : memref<9x8x4xbf16, #tpu.memory_space<vmem>>, vector<1x8x4xbf16>
    %27 = vector.shape_cast %26 : vector<1x8x4xbf16> to vector<8x4xbf16>
    %28 = vector.extract_strided_slice %1 {offsets = [0, 22], sizes = [4, 512], strides = [1, 1]} : vector<4x640xbf16> to vector<4x512xbf16>
    %cst_19 = arith.constant dense<0.000000e+00> : vector<8x512xf32>
    %29 = tpu.matmul %27, %28, %cst_19 {dimension_numbers = #tpu.dot_dimension_numbers<[1], [0], [0], [1], [0, 0, 1, 1], [], []>} : vector<8x4xbf16>, vector<4x512xbf16>, vector<8x512xf32> -> vector<8x512xf32>
    %30 = arith.addf %25, %29 : vector<8x512xf32>
    %c6 = arith.constant 6 : index
    %c0_20 = arith.constant 0 : index
    %c0_21 = arith.constant 0 : index
    %31 = vector.load %arg2[%c6, %c0_20, %c0_21] : memref<9x8x4xbf16, #tpu.memory_space<vmem>>, vector<1x8x4xbf16>
    %32 = vector.shape_cast %31 : vector<1x8x4xbf16> to vector<8x4xbf16>
    %33 = vector.extract_strided_slice %1 {offsets = [0, 40], sizes = [4, 512], strides = [1, 1]} : vector<4x640xbf16> to vector<4x512xbf16>
    %cst_22 = arith.constant dense<0.000000e+00> : vector<8x512xf32>
    %34 = tpu.matmul %32, %33, %cst_22 {dimension_numbers = #tpu.dot_dimension_numbers<[1], [0], [0], [1], [0, 0, 1, 1], [], []>} : vector<8x4xbf16>, vector<4x512xbf16>, vector<8x512xf32> -> vector<8x512xf32>
    %35 = arith.addf %30, %34 : vector<8x512xf32>
    %c7 = arith.constant 7 : index
    %c0_23 = arith.constant 0 : index
    %c0_24 = arith.constant 0 : index
    %36 = vector.load %arg2[%c7, %c0_23, %c0_24] : memref<9x8x4xbf16, #tpu.memory_space<vmem>>, vector<1x8x4xbf16>
    %37 = vector.shape_cast %36 : vector<1x8x4xbf16> to vector<8x4xbf16>
    %38 = vector.extract_strided_slice %1 {offsets = [0, 41], sizes = [4, 512], strides = [1, 1]} : vector<4x640xbf16> to vector<4x512xbf16>
    %cst_25 = arith.constant dense<0.000000e+00> : vector<8x512xf32>
    %39 = tpu.matmul %37, %38, %cst_25 {dimension_numbers = #tpu.dot_dimension_numbers<[1], [0], [0], [1], [0, 0, 1, 1], [], []>} : vector<8x4xbf16>, vector<4x512xbf16>, vector<8x512xf32> -> vector<8x512xf32>
    %40 = arith.addf %35, %39 : vector<8x512xf32>
    %c8 = arith.constant 8 : index
    %c0_26 = arith.constant 0 : index
    %c0_27 = arith.constant 0 : index
    %41 = vector.load %arg2[%c8, %c0_26, %c0_27] : memref<9x8x4xbf16, #tpu.memory_space<vmem>>, vector<1x8x4xbf16>
    %42 = vector.shape_cast %41 : vector<1x8x4xbf16> to vector<8x4xbf16>
    %43 = vector.extract_strided_slice %1 {offsets = [0, 42], sizes = [4, 512], strides = [1, 1]} : vector<4x640xbf16> to vector<4x512xbf16>
    %cst_28 = arith.constant dense<0.000000e+00> : vector<8x512xf32>
    %44 = tpu.matmul %42, %43, %cst_28 {dimension_numbers = #tpu.dot_dimension_numbers<[1], [0], [0], [1], [0, 0, 1, 1], [], []>} : vector<8x4xbf16>, vector<4x512xbf16>, vector<8x512xf32> -> vector<8x512xf32>
    %45 = arith.addf %40, %44 : vector<8x512xf32>
    %c0_29 = arith.constant 0 : index
    %c0_30 = arith.constant 0 : index
    %46 = vector.load %arg3[%c0_29, %c0_30] : memref<8x1xf32, #tpu.memory_space<vmem>>, vector<8x1xf32>
    %47 = vector.broadcast %46 : vector<8x1xf32> to vector<8x512xf32>
    %48 = arith.addf %45, %47 : vector<8x512xf32>
    %cst_31 = arith.constant 0.000000e+00 : f32
    %49 = vector.broadcast %cst_31 : f32 to vector<8x512xf32>
    %50 = arith.maximumf %48, %49 : vector<8x512xf32>
    %c0_32 = arith.constant 0 : index
    %c0_33 = arith.constant 0 : index
    %c0_34 = arith.constant 0 : index
    %51 = vector.load %arg5[%c0_32, %c0_33, %c0_34] : memref<1x8x512xf32, #tpu.memory_space<vmem>>, vector<1x8x512xf32>
    %52 = vector.shape_cast %51 : vector<1x8x512xf32> to vector<8x512xf32>
    %53 = vector.shape_cast %50 : vector<8x512xf32> to vector<1x8x512xf32>
    tpu.vector_store %arg5[%c0_32, %c0_33, %c0_34], %53 {strides = array<i32>} : memref<1x8x512xf32, #tpu.memory_space<vmem>>, vector<1x8x512xf32>,
    %c0_35 = arith.constant 0 : index
    %c0_36 = arith.constant 0 : index
    %54 = vector.load %arg4[%c0_35, %c0_36] : memref<1x512xf32, #tpu.memory_space<vmem>>, vector<1x512xf32>
    %55 = vector.broadcast %54 : vector<1x512xf32> to vector<8x512xf32>
    %56 = arith.mulf %50, %55 : vector<8x512xf32>
    %cst_37 = arith.constant dense<0.000000e+00> : vector<8xf32>
    %57 = vector.multi_reduction <add>, %56, %cst_37 [1] : vector<8x512xf32> to vector<8xf32>
    %58 = vector.shape_cast %57 : vector<8xf32> to vector<8x1xf32>
    %c0_38 = arith.constant 0 : index
    %c0_39 = arith.constant 0 : index
    %c0_40 = arith.constant 0 : index
    %59 = vector.load %arg6[%c0_38, %c0_39, %c0_40] : memref<1x8x1xf32, #tpu.memory_space<vmem>>, vector<1x8x1xf32>
    %60 = vector.shape_cast %59 : vector<1x8x1xf32> to vector<8x1xf32>
    %61 = vector.shape_cast %58 : vector<8x1xf32> to vector<1x8x1xf32>
    tpu.vector_store %arg6[%c0_38, %c0_39, %c0_40], %61 {strides = array<i32>} : memref<1x8x1xf32, #tpu.memory_space<vmem>>, vector<1x8x1xf32>,
    %62 = arith.mulf %56, %56 : vector<8x512xf32>
    %cst_41 = arith.constant dense<0.000000e+00> : vector<8xf32>
    %63 = vector.multi_reduction <add>, %62, %cst_41 [1] : vector<8x512xf32> to vector<8xf32>
    %64 = vector.shape_cast %63 : vector<8xf32> to vector<8x1xf32>
    %c0_42 = arith.constant 0 : index
    %c0_43 = arith.constant 0 : index
    %c0_44 = arith.constant 0 : index
    %65 = vector.load %arg7[%c0_42, %c0_43, %c0_44] : memref<1x8x1xf32, #tpu.memory_space<vmem>>, vector<1x8x1xf32>
    %66 = vector.shape_cast %65 : vector<1x8x1xf32> to vector<8x1xf32>
    %67 = vector.shape_cast %64 : vector<8x1xf32> to vector<1x8x1xf32>
    tpu.vector_store %arg7[%c0_42, %c0_43, %c0_44], %67 {strides = array<i32>} : memref<1x8x1xf32, #tpu.memory_space<vmem>>, vector<1x8x1xf32>,
    return
  }
  func.func @transform_0(%arg0: i32) -> (i32, i32, i32) {
    %c0_i32 = arith.constant 0 : i32
    %c0_i32_0 = arith.constant 0 : i32
    %c0_i32_1 = arith.constant 0 : i32
    return %arg0, %c0_i32, %c0_i32_0 : i32, i32, i32
  }
  func.func @transform_1(%arg0: i32) -> (i32, i32, i32) {
    %c0_i32 = arith.constant 0 : i32
    %c0_i32_0 = arith.constant 0 : i32
    %c0_i32_1 = arith.constant 0 : i32
    %c0_i32_2 = arith.constant 0 : i32
    return %c0_i32, %c0_i32_0, %c0_i32_1 : i32, i32, i32
  }
  func.func @transform_2(%arg0: i32) -> (i32, i32) {
    %c0_i32 = arith.constant 0 : i32
    %c0_i32_0 = arith.constant 0 : i32
    %c0_i32_1 = arith.constant 0 : i32
    return %c0_i32, %c0_i32_0 : i32, i32
  }
  func.func @transform_3(%arg0: i32) -> (i32, i32) {
    %c0_i32 = arith.constant 0 : i32
    %c0_i32_0 = arith.constant 0 : i32
    %c0_i32_1 = arith.constant 0 : i32
    return %c0_i32, %c0_i32_0 : i32, i32
  }
  func.func @transform_4(%arg0: i32) -> (i32, i32, i32) {
    %c0_i32 = arith.constant 0 : i32
    %c0_i32_0 = arith.constant 0 : i32
    %c0_i32_1 = arith.constant 0 : i32
    return %arg0, %c0_i32, %c0_i32_0 : i32, i32, i32
  }
  func.func @transform_5(%arg0: i32) -> (i32, i32, i32) {
    %c0_i32 = arith.constant 0 : i32
    %c0_i32_0 = arith.constant 0 : i32
    %c0_i32_1 = arith.constant 0 : i32
    return %arg0, %c0_i32, %c0_i32_0 : i32, i32, i32
  }
  func.func @transform_6(%arg0: i32) -> (i32, i32, i32) {
    %c0_i32 = arith.constant 0 : i32
    %c0_i32_0 = arith.constant 0 : i32
    %c0_i32_1 = arith.constant 0 : i32
    return %arg0, %c0_i32, %c0_i32_0 : i32, i32, i32
  }
}

</mosaic_0001>

<llo_original>
// kernel: tpu_custom_call.1
$region0: #{tpu_custom_call.1}
  #allocation0 [shape = 'u32[]', space=smem, size = 0x4, offset = 0x4, fixed_abs, tag = 'smem constant byte address 0x4 - core index']
  #allocation1 [shape = 'u32[72,128]{1,0:T(1,128)}', space=vmem, size = 0x9000, scoped, tag = 'internal scratch']
  %s0 = inlined_call_operand.vmem [shape: bf16[2,4,640], index: 0, kind: input, shape index: {}]
  %s1 = inlined_call_operand.vmem [shape: bf16[9,8,4], index: 1, kind: input, shape index: {}]
  %s2 = inlined_call_operand.vmem [shape: f32[8,1], index: 2, kind: input, shape index: {}]
  %s3 = inlined_call_operand.vmem [shape: f32[1,512], index: 3, kind: input, shape index: {}]
  %s4 = inlined_call_operand.hbm [shape: f32[2,8,512], index: 4, kind: output, shape index: {0}]
  %s5 = inlined_call_operand.vmem [shape: f32[2,8,1], index: 5, kind: output, shape index: {1}]
  %s6 = inlined_call_operand.vmem [shape: f32[2,8,1], index: 6, kind: output, shape index: {2}]
  %7 = xla_tuple %s4, %s5, %s6
  %s8 = sld [smem:[#allocation0]]
  $region65: #{tpu_custom_call.1} parent=0
    _
  %s10 = ssub.s32 1, %s8
  %s11 = scalar_select 0, %s10, %s8
  $region1: #{tpu_custom_call.1} parent=0
    #allocation2 [shape = 'u8[32768]{0}', space=vmem, size = 0x8000, scoped, tag = 'output window, operand 0']
    #allocation3 [shape = 's32[2]{0}', space=sflag, size = 0x8, scoped, tag = 'scoped memory for tpu_custom_call.1']
    %12 = vsyncpa [#allocation3], 0
    %s13 = scalar_lea.sflag [#allocation3], 1
    %14 = vsyncpa %s13, 0
    loop: start=0, step=1, limit=4
    $region2: #{tpu_custom_call.1} parent=1 // loop_pre_header
      _
    $region3: #{tpu_custom_call.1} parent=1 // loop_header
      %s16 = sphi 0, %s20
      %p17 = scmp.ge.s32.totalorder %s16, 4
      %s26 = sphi 0, %s28
      %s29 = sphi 0, %s26
      %s30 = sphi 0, %s29
      %s46 = sphi 0, %s30
      %s50 = sphi 0, %s50
      %s52 = sphi 0, %s50
      %s53 = sphi 0, %s52
      %s67 = sphi 0, %s53
      %s71 = sphi 0, %s71
      %s73 = sphi 0, %s71
      %s74 = sphi 0, %s73
      %s88 = sphi 0, %s74
      %s92 = sphi 0, %s92
      %s94 = sphi 0, %s92
      %s95 = sphi 0, %s94
      %s109 = sphi 0, %s95
      %s115 = sphi 0, %s117
      %s118 = sphi 0, %s115
      %s119 = sphi 0, %s118
      %s135 = sphi 0, %s119
      %s141 = sphi 0, %s143
      %s144 = sphi 0, %s141
      %s145 = sphi 0, %s144
      %s161 = sphi 0, %s145
      %s167 = sphi 0, %s169
      %s170 = sphi 0, %s167
      %s171 = sphi 0, %s170
      %s187 = sphi 0, %s171
    $region4: #{tpu_custom_call.1} parent=1 // loop_header_branch
      %19 = sbr.rel (%p17) target = $region8
    $region5: #{tpu_custom_call.1} parent=1 // loop_body
      %s21 = ssub.s32 %s16, 1
      %s22 = ssub.s32 %s16, 2
      %s23 = sadd.s32 %s16, 1
      %s24 = ssub.s32 %s16, %s23
      %p25 = scmp.eq.s32.totalorder %s24, 0
      %s27 = sadd.s32 %s26, 1
      %s28 = scalar_select %p25, %s26, %s27
      %p31 = pneg %p25
      %p32 = scmp.eq.s32.totalorder %s16, 1
      %p33 = por %p31, %p32
      %p34 = scmp.ne.s32.totalorder %s26, %s29
      %p35 = scmp.eq.s32.totalorder %s16, 0
      %p36 = por %p34, %p35
      %p37 = scmp.ne.s32.totalorder %s26, %s29
      %p38 = scmp.eq.s32.totalorder %s21, 1
      %p39 = por %p37, %p38
      %p40 = scmp.ne.s32.totalorder %s29, %s30
      %p41 = scmp.eq.s32.totalorder %s21, 0
      %p42 = por %p40, %p41
      %p43 = scmp.ne.s32.totalorder %s29, %s30
      %p44 = scmp.eq.s32.totalorder %s22, 1
      %p45 = por %p43, %p44
      %p47 = scmp.ne.s32.totalorder %s30, %s46
      %p48 = scmp.eq.s32.totalorder %s22, 0
      %p49 = por %p47, %p48
      %s51 = sadd.s32 %s50, 1
      %p54 = scmp.eq.s32.totalorder %s16, 1
      %p55 = scmp.ne.s32.totalorder %s50, %s52
      %p56 = scmp.eq.s32.totalorder %s16, 0
      %p57 = por %p55, %p56
      %p58 = scmp.ne.s32.totalorder %s50, %s52
      %p59 = scmp.eq.s32.totalorder %s21, 1
      %p60 = por %p58, %p59
      %p61 = scmp.ne.s32.totalorder %s52, %s53
      %p62 = scmp.eq.s32.totalorder %s21, 0
      %p63 = por %p61, %p62
      %p64 = scmp.ne.s32.totalorder %s52, %s53
      %p65 = scmp.eq.s32.totalorder %s22, 1
      %p66 = por %p64, %p65
      %p68 = scmp.ne.s32.totalorder %s53, %s67
      %p69 = scmp.eq.s32.totalorder %s22, 0
      %p70 = por %p68, %p69
      %s72 = sadd.s32 %s71, 1
      %p75 = scmp.eq.s32.totalorder %s16, 1
      %p76 = scmp.ne.s32.totalorder %s71, %s73
      %p77 = scmp.eq.s32.totalorder %s16, 0
      %p78 = por %p76, %p77
      %p79 = scmp.ne.s32.totalorder %s71, %s73
      %p80 = scmp.eq.s32.totalorder %s21, 1
      %p81 = por %p79, %p80
      %p82 = scmp.ne.s32.totalorder %s73, %s74
      %p83 = scmp.eq.s32.totalorder %s21, 0
      %p84 = por %p82, %p83
      %p85 = scmp.ne.s32.totalorder %s73, %s74
      %p86 = scmp.eq.s32.totalorder %s22, 1
      %p87 = por %p85, %p86
      %p89 = scmp.ne.s32.totalorder %s74, %s88
      %p90 = scmp.eq.s32.totalorder %s22, 0
      %p91 = por %p89, %p90
      %s93 = sadd.s32 %s92, 1
      %p96 = scmp.eq.s32.totalorder %s16, 1
      %p97 = scmp.ne.s32.totalorder %s92, %s94
      %p98 = scmp.eq.s32.totalorder %s16, 0
      %p99 = por %p97, %p98
      %p100 = scmp.ne.s32.totalorder %s92, %s94
      %p101 = scmp.eq.s32.totalorder %s21, 1
      %p102 = por %p100, %p101
      %p103 = scmp.ne.s32.totalorder %s94, %s95
      %p104 = scmp.eq.s32.totalorder %s21, 0
      %p105 = por %p103, %p104
      %p106 = scmp.ne.s32.totalorder %s94, %s95
      %p107 = scmp.eq.s32.totalorder %s22, 1
      %p108 = por %p106, %p107
      %p110 = scmp.ne.s32.totalorder %s95, %s109
      %p111 = scmp.eq.s32.totalorder %s22, 0
      %p112 = por %p110, %p111
      %s113 = ssub.s32 %s16, %s23
      %p114 = scmp.eq.s32.totalorder %s113, 0
      %s116 = sadd.s32 %s115, 1
      %s117 = scalar_select %p114, %s115, %s116
      %p120 = pneg %p114
      %p121 = scmp.eq.s32.totalorder %s16, 1
      %p122 = por %p120, %p121
      %p123 = scmp.ne.s32.totalorder %s115, %s118
      %p124 = scmp.eq.s32.totalorder %s16, 0
      %p125 = por %p123, %p124
      %p126 = scmp.ne.s32.totalorder %s115, %s118
      %p127 = scmp.eq.s32.totalorder %s21, 1
      %p128 = por %p126, %p127
      %p129 = scmp.ne.s32.totalorder %s118, %s119
      %p130 = scmp.eq.s32.totalorder %s21, 0
      %p131 = por %p129, %p130
      %p132 = scmp.ne.s32.totalorder %s118, %s119
      %p133 = scmp.eq.s32.totalorder %s22, 1
      %p134 = por %p132, %p133
      %p136 = scmp.ne.s32.totalorder %s119, %s135
      %p137 = scmp.eq.s32.totalorder %s22, 0
      %p138 = por %p136, %p137
      %s139 = ssub.s32 %s16, %s23
      %p140 = scmp.eq.s32.totalorder %s139, 0
      %s142 = sadd.s32 %s141, 1
      %s143 = scalar_select %p140, %s141, %s142
      %p146 = pneg %p140
      %p147 = scmp.eq.s32.totalorder %s16, 1
      %p148 = por %p146, %p147
      %p149 = scmp.ne.s32.totalorder %s141, %s144
      %p150 = scmp.eq.s32.totalorder %s16, 0
      %p151 = por %p149, %p150
      %p152 = scmp.ne.s32.totalorder %s141, %s144
      %p153 = scmp.eq.s32.totalorder %s21, 1
      %p154 = por %p152, %p153
      %p155 = scmp.ne.s32.totalorder %s144, %s145
      %p156 = scmp.eq.s32.totalorder %s21, 0
      %p157 = por %p155, %p156
      %p158 = scmp.ne.s32.totalorder %s144, %s145
      %p159 = scmp.eq.s32.totalorder %s22, 1
      %p160 = por %p158, %p159
      %p162 = scmp.ne.s32.totalorder %s145, %s161
      %p163 = scmp.eq.s32.totalorder %s22, 0
      %p164 = por %p162, %p163
      %s165 = ssub.s32 %s16, %s23
      %p166 = scmp.eq.s32.totalorder %s165, 0
      %s168 = sadd.s32 %s167, 1
      %s169 = scalar_select %p166, %s167, %s168
      %p172 = pneg %p166
      %p173 = scmp.eq.s32.totalorder %s16, 1
      %p174 = por %p172, %p173
      %p175 = scmp.ne.s32.totalorder %s167, %s170
      %p176 = scmp.eq.s32.totalorder %s16, 0
      %p177 = por %p175, %p176
      %p178 = scmp.ne.s32.totalorder %s167, %s170
      %p179 = scmp.eq.s32.totalorder %s21, 1
      %p180 = por %p178, %p179
      %p181 = scmp.ne.s32.totalorder %s170, %s171
      %p182 = scmp.eq.s32.totalorder %s21, 0
      %p183 = por %p181, %p182
      %p184 = scmp.ne.s32.totalorder %s170, %s171
      %p185 = scmp.eq.s32.totalorder %s22, 1
      %p186 = por %p184, %p185
      %p188 = scmp.ne.s32.totalorder %s171, %s187
      %p189 = scmp.eq.s32.totalorder %s22, 0
      %p190 = por %p188, %p189
      %p191 = scmp.le.s32.totalorder 1, %s16
      %p192 = scmp.lt.s32.totalorder %s16, 3
      %p193 = pnand %p191, %p192
      %p194 = pneg %p193
      // Predicated region
      $region9: #{tpu_custom_call.1} parent=5 // pred_check
        _
      $region10: #{tpu_custom_call.1} parent=5 // pred_check_branch
        %196 = sbr.rel (%p193) target = $region12
      $region11: #{tpu_custom_call.1} parent=5 // pred_region
        %s197 = ssub.s32 %s16, 1
        // Predicated region
        $region13: #{tpu_custom_call.1} parent=11 // pred_check
          %p198 = pneg %p63
        $region14: #{tpu_custom_call.1} parent=11 // pred_check_branch
          %200 = sbr.rel (%p198) target = $region16
        $region15: #{tpu_custom_call.1} parent=11 // pred_region
          _
        $region16: #{tpu_custom_call.1} parent=11 // pred_fallthru
          _
        // Predicated region
        $region17: #{tpu_custom_call.1} parent=11 // pred_check
          %p201 = pneg %p84
        $region18: #{tpu_custom_call.1} parent=11 // pred_check_branch
          %203 = sbr.rel (%p201) target = $region20
        $region19: #{tpu_custom_call.1} parent=11 // pred_region
          _
        $region20: #{tpu_custom_call.1} parent=11 // pred_fallthru
          _
        // Predicated region
        $region21: #{tpu_custom_call.1} parent=11 // pred_check
          %p204 = pneg %p105
        $region22: #{tpu_custom_call.1} parent=11 // pred_check_branch
          %206 = sbr.rel (%p204) target = $region24
        $region23: #{tpu_custom_call.1} parent=11 // pred_region
          _
        $region24: #{tpu_custom_call.1} parent=11 // pred_fallthru
          _
      $region12: #{tpu_custom_call.1} parent=5 // pred_fallthru
        _
      %p207 = scmp.lt.s32.totalorder %s16, 2
      // Predicated region
      $region25: #{tpu_custom_call.1} parent=5 // pred_check
        %p208 = pneg %p207
      $region26: #{tpu_custom_call.1} parent=5 // pred_check_branch
        %210 = sbr.rel (%p208) target = $region28
      $region27: #{tpu_custom_call.1} parent=5 // pred_region
        // Predicated region
        $region29: #{tpu_custom_call.1} parent=27 // pred_check
          %p211 = pneg %p36
        $region30: #{tpu_custom_call.1} parent=27 // pred_check_branch
          %213 = sbr.rel (%p211) target = $region32
        $region31: #{tpu_custom_call.1} parent=27 // pred_region
          %p214 = scmp.lt.s32.totalorder %s16, 1
          %s215 = scalar_select %p214, %s16, 1
          %s216 = smul.addr %s215, 5
          %s217 = smul.addr %s216, 2
          %s218 = scalar_lea.vmem %s0, %s217
        $region32: #{tpu_custom_call.1} parent=27 // pred_fallthru
          _
      $region28: #{tpu_custom_call.1} parent=5 // pred_fallthru
        _
      %p219 = scmp.le.s32.totalorder 1, %s16
      %p220 = scmp.lt.s32.totalorder %s16, 3
      %p221 = pnand %p219, %p220
      %p222 = pneg %p221
      // Predicated region
      $region33: #{tpu_custom_call.1} parent=5 // pred_check
        _
      $region34: #{tpu_custom_call.1} parent=5 // pred_check_branch
        %224 = sbr.rel (%p221) target = $region36
      $region35: #{tpu_custom_call.1} parent=5 // pred_region
        %s225 = ssub.s32 %s16, 1
        %p226 = scmp.lt.s32.totalorder %s21, 1
        %s227 = scalar_select %p226, %s21, 1
        %s228 = smul.addr %s227, 5
        %s229 = smul.addr %s228, 2
        %s230 = scalar_lea.vmem %s0, %s229
        %p231 = pneg %p42
        %p232 = pneg %p39
        %p233 = pneg %p63
        %p234 = pneg %p60
        %p235 = pneg %p84
        %p236 = pneg %p81
        %p237 = pneg %p105
        %p238 = pneg %p102
        %p239 = pneg %p131
        %p240 = pneg %p128
        %s241 = sand.u32 %s118, 1
        %s242 = scalar_lea.sflag [#allocation3], %s241
        %s243 = sand.u32 %s118, 1
        %s244 = smul.addr %s243, 32
        %s245 = scalar_lea.vmem [#allocation2], %s244
        %p246 = pneg %p157
        %p247 = pneg %p154
        %p248 = scmp.lt.s32.totalorder %s21, 1
        %s249 = scalar_select %p248, %s21, 1
        %s250 = smul.addr %s249, 8
        %s251 = scalar_lea.vmem %s5, %s250
        %p252 = pneg %p183
        %p253 = pneg %p180
        %p254 = scmp.lt.s32.totalorder %s21, 1
        %s255 = scalar_select %p254, %s21, 1
        %s256 = smul.addr %s255, 8
        %s257 = scalar_lea.vmem %s6, %s256
        %p258 = scmp.lt.s32.totalorder %s21, 1
        %s259 = scalar_select %p258, %s21, 1
        %s260 = smul.addr %s259, 5
        %s261 = smul.addr %s260, 2
        %s262 = scalar_lea.vmem %s0, %s261
        %p263 = scmp.lt.s32.totalorder %s21, 1
        %s264 = scalar_select %p263, %s21, 1
        %s265 = smul.addr %s264, 8
        %s266 = scalar_lea.vmem %s5, %s265
        %p267 = scmp.lt.s32.totalorder %s21, 1
        %s268 = scalar_select %p267, %s21, 1
        %s269 = smul.addr %s268, 8
        %s270 = scalar_lea.vmem %s6, %s269
        %v272 = vld [vmem:[%s262] sm:$0xff]
        %v273 = vld [vmem:[%s262 + $0x8] sm:$0x3]
        %v274 = vld [vmem:[%s1] sm:$0xf]
        %s275 = scalar_lea.vmem %s1, 4
        %v276 = vld [vmem:[%s275] sm:$0xf]
        %278 = vst [vmem:[#allocation1] ss:$4 sm:$0xff] %v272
        %s280 = scalar_lea.vmem [#allocation1], 32
        %281 = vst [vmem:[%s280] ss:$4 sm:$0xff] %v273
        %v282 = vld.sshfl [vmem:[#allocation1] sm:$0xff pattern:$0x73625140]
        %v284 = vld.sshfl [vmem:[#allocation1 + $0x8] sm:$0xff pattern:$0x73625140]
        %v286 = vld.sshfl [vmem:[#allocation1 + $0x10] sm:$0xff pattern:$0x73625140]
        %v288 = vld.sshfl [vmem:[#allocation1 + $0x18] sm:$0xff pattern:$0x73625140]
        %v290 = vld.sshfl [vmem:[#allocation1 + $0x20] sm:$0xff pattern:$0x73625140]
        %292 = vrot.lane.b32.xlu0 %v282, 127
        %v293 = vpop.permute.xlu0 %292
        %294 = vrot.lane.b32.xlu0 %v284, 127
        %v295 = vpop.permute.xlu0 %294
        %296 = vrot.lane.b32.xlu0 %v286, 127
        %v297 = vpop.permute.xlu0 %296
        %298 = vrot.lane.b32.xlu0 %v288, 127
        %v299 = vpop.permute.xlu0 %298
        %300 = vrot.lane.b32.xlu0 %v290, 127
        %v301 = vpop.permute.xlu0 %300
        %vm302 = vcmask 1039360
        %v303 = vsel %vm302, %v293, %v295
        %v304 = vsel %vm302, %v295, %v297
        %v305 = vsel %vm302, %v297, %v299
        %v306 = vsel %vm302, %v299, %v301
        %vm307 = vcmask 31744
        %v309 = vsel %vm307, %v276, 0
        %vm311 = vcmask 1041408
        %v313 = vsel %vm311, %v303, 0
        %v316 = vsel %vm311, %v304, 0
        %v319 = vsel %vm311, %v305, 0
        %v322 = vsel %vm311, %v306, 0
        %324 = vmatpush.bf16.msra.mxu0 0
        %325 = vmatpush.bf16.msra.mxu0 0
        %326 = vmatpush.bf16.msra.mxu0 0
        %327 = vmatpush.bf16.msra.mxu0 0
        %328 = vmatpush.bf16.msra.mxu0 0
        %329 = vmatpush.bf16.msra.mxu0 0
        %330 = vmatpush.bf16.msra.mxu0 0
        %331 = vmatpush.bf16.msra.mxu0 %v313
        %332 = vmatmul.bf16.gmra.mxu0 %v309
        %v333 = vpop.f32.mrf.mxu0
        %v334 = vadd.f32 0.0, %v333
        %v335 = vpop.f32.mrf.mxu0
        %336 = vdwg.mxu0
        %337 = vmatpush.bf16.msra.mxu0 0
        %338 = vmatpush.bf16.msra.mxu0 0
        %339 = vmatpush.bf16.msra.mxu0 0
        %340 = vmatpush.bf16.msra.mxu0 0
        %341 = vmatpush.bf16.msra.mxu0 0
        %342 = vmatpush.bf16.msra.mxu0 0
        %343 = vmatpush.bf16.msra.mxu0 0
        %344 = vmatpush.bf16.msra.mxu0 %v316
        %345 = vmatmul.bf16.gmra.mxu0 %v309
        %v346 = vpop.f32.mrf.mxu0
        %v347 = vadd.f32 0.0, %v346
        %v348 = vpop.f32.mrf.mxu0
        %349 = vdwg.mxu0
        %350 = vmatpush.bf16.msra.mxu0 0
        %351 = vmatpush.bf16.msra.mxu0 0
        %352 = vmatpush.bf16.msra.mxu0 0
        %353 = vmatpush.bf16.msra.mxu0 0
        %354 = vmatpush.bf16.msra.mxu0 0
        %355 = vmatpush.bf16.msra.mxu0 0
        %356 = vmatpush.bf16.msra.mxu0 0
        %357 = vmatpush.bf16.msra.mxu0 %v319
        %358 = vmatmul.bf16.gmra.mxu0 %v309
        %v359 = vpop.f32.mrf.mxu0
        %v360 = vadd.f32 0.0, %v359
        %v361 = vpop.f32.mrf.mxu0
        %362 = vdwg.mxu0
        %363 = vmatpush.bf16.msra.mxu0 0
        %364 = vmatpush.bf16.msra.mxu0 0
        %365 = vmatpush.bf16.msra.mxu0 0
        %366 = vmatpush.bf16.msra.mxu0 0
        %367 = vmatpush.bf16.msra.mxu0 0
        %368 = vmatpush.bf16.msra.mxu0 0
        %369 = vmatpush.bf16.msra.mxu0 0
        %370 = vmatpush.bf16.msra.mxu0 %v322
        %371 = vmatmul.bf16.gmra.mxu0 %v309
        %v372 = vpop.f32.mrf.mxu0
        %v373 = vadd.f32 0.0, %v372
        %v374 = vpop.f32.mrf.mxu0
        %375 = vdwg.mxu0
        %376 = vst [vmem:[#allocation1] ss:$4 sm:$0xff] %v272
        %v377 = vld.sshfl [vmem:[#allocation1] sm:$0xff pattern:$0x73625140]
        %v378 = vld.sshfl [vmem:[#allocation1 + $0x8] sm:$0xff pattern:$0x73625140]
        %v379 = vld.sshfl [vmem:[#allocation1 + $0x10] sm:$0xff pattern:$0x73625140]
        %v380 = vld.sshfl [vmem:[#allocation1 + $0x18] sm:$0xff pattern:$0x73625140]
        %v382 = vsel %vm307, %v274, 0
        %v384 = vsel %vm311, %v377, 0
        %v386 = vsel %vm311, %v378, 0
        %v388 = vsel %vm311, %v379, 0
        %v390 = vsel %vm311, %v380, 0
        %392 = vmatpush.bf16.msra.mxu0 0
        %393 = vmatpush.bf16.msra.mxu0 0
        %394 = vmatpush.bf16.msra.mxu0 0
        %395 = vmatpush.bf16.msra.mxu0 0
        %396 = vmatpush.bf16.msra.mxu0 0
        %397 = vmatpush.bf16.msra.mxu0 0
        %398 = vmatpush.bf16.msra.mxu0 0
        %399 = vmatpush.bf16.msra.mxu0 %v384
        %400 = vmatmul.bf16.gmra.mxu0 %v382
        %v401 = vpop.f32.mrf.mxu0
        %v402 = vadd.f32 %v334, %v401
        %v403 = vpop.f32.mrf.mxu0
        %404 = vdwg.mxu0
        %405 = vmatpush.bf16.msra.mxu0 0
        %406 = vmatpush.bf16.msra.mxu0 0
        %407 = vmatpush.bf16.msra.mxu0 0
        %408 = vmatpush.bf16.msra.mxu0 0
        %409 = vmatpush.bf16.msra.mxu0 0
        %410 = vmatpush.bf16.msra.mxu0 0
        %411 = vmatpush.bf16.msra.mxu0 0
        %412 = vmatpush.bf16.msra.mxu0 %v386
        %413 = vmatmul.bf16.gmra.mxu0 %v382
        %v414 = vpop.f32.mrf.mxu0
        %v415 = vadd.f32 %v347, %v414
        %v416 = vpop.f32.mrf.mxu0
        %417 = vdwg.mxu0
        %418 = vmatpush.bf16.msra.mxu0 0
        %419 = vmatpush.bf16.msra.mxu0 0
        %420 = vmatpush.bf16.msra.mxu0 0
        %421 = vmatpush.bf16.msra.mxu0 0
        %422 = vmatpush.bf16.msra.mxu0 0
        %423 = vmatpush.bf16.msra.mxu0 0
        %424 = vmatpush.bf16.msra.mxu0 0
        %425 = vmatpush.bf16.msra.mxu0 %v388
        %426 = vmatmul.bf16.gmra.mxu0 %v382
        %v427 = vpop.f32.mrf.mxu0
        %v428 = vadd.f32 %v360, %v427
        %v429 = vpop.f32.mrf.mxu0
        %430 = vdwg.mxu0
        %431 = vmatpush.bf16.msra.mxu0 0
        %432 = vmatpush.bf16.msra.mxu0 0
        %433 = vmatpush.bf16.msra.mxu0 0
        %434 = vmatpush.bf16.msra.mxu0 0
        %435 = vmatpush.bf16.msra.mxu0 0
        %436 = vmatpush.bf16.msra.mxu0 0
        %437 = vmatpush.bf16.msra.mxu0 0
        %438 = vmatpush.bf16.msra.mxu0 %v390
        %439 = vmatmul.bf16.gmra.mxu0 %v382
        %v440 = vpop.f32.mrf.mxu0
        %v441 = vadd.f32 %v373, %v440
        %v442 = vpop.f32.mrf.mxu0
        %443 = vdwg.mxu0
        %s444 = scalar_lea.vmem %s1, 8
        %v445 = vld [vmem:[%s444] sm:$0xf]
        %446 = vst [vmem:[#allocation1] ss:$4 sm:$0xff] %v272
        %s447 = scalar_lea.vmem [#allocation1], 32
        %448 = vst [vmem:[%s447] ss:$4 sm:$0xff] %v273
        %v449 = vld.sshfl [vmem:[#allocation1] sm:$0xff pattern:$0x73625140]
        %v451 = vld.sshfl [vmem:[#allocation1 + $0x8] sm:$0xff pattern:$0x73625140]
        %v453 = vld.sshfl [vmem:[#allocation1 + $0x10] sm:$0xff pattern:$0x73625140]
        %v455 = vld.sshfl [vmem:[#allocation1 + $0x18] sm:$0xff pattern:$0x73625140]
        %v457 = vld.sshfl [vmem:[#allocation1 + $0x20] sm:$0xff pattern:$0x73625140]
        %459 = vrot.lane.b32.xlu0 %v449, 126
        %v460 = vpop.permute.xlu0 %459
        %461 = vrot.lane.b32.xlu0 %v451, 126
        %v462 = vpop.permute.xlu0 %461
        %463 = vrot.lane.b32.xlu0 %v453, 126
        %v464 = vpop.permute.xlu0 %463
        %465 = vrot.lane.b32.xlu0 %v455, 126
        %v466 = vpop.permute.xlu0 %465
        %467 = vrot.lane.b32.xlu0 %v457, 126
        %v468 = vpop.permute.xlu0 %467
        %vm469 = vcmask 1031168
        %v470 = vsel %vm469, %v460, %v462
        %v471 = vsel %vm469, %v462, %v464
        %v472 = vsel %vm469, %v464, %v466
        %v473 = vsel %vm469, %v466, %v468
        %v475 = vsel %vm307, %v445, 0
        %v478 = vsel %vm311, %v470, 0
        %v481 = vsel %vm311, %v471, 0
        %v484 = vsel %vm311, %v472, 0
        %v487 = vsel %vm311, %v473, 0
        %489 = vmatpush.bf16.msra.mxu0 0
        %490 = vmatpush.bf16.msra.mxu0 0
        %491 = vmatpush.bf16.msra.mxu0 0
        %492 = vmatpush.bf16.msra.mxu0 0
        %493 = vmatpush.bf16.msra.mxu0 0
        %494 = vmatpush.bf16.msra.mxu0 0
        %495 = vmatpush.bf16.msra.mxu0 0
        %496 = vmatpush.bf16.msra.mxu0 %v478
        %497 = vmatmul.bf16.gmra.mxu0 %v475
        %v498 = vpop.f32.mrf.mxu0
        %v499 = vadd.f32 0.0, %v498
        %v500 = vpop.f32.mrf.mxu0
        %501 = vdwg.mxu0
        %502 = vmatpush.bf16.msra.mxu0 0
        %503 = vmatpush.bf16.msra.mxu0 0
        %504 = vmatpush.bf16.msra.mxu0 0
        %505 = vmatpush.bf16.msra.mxu0 0
        %506 = vmatpush.bf16.msra.mxu0 0
        %507 = vmatpush.bf16.msra.mxu0 0
        %508 = vmatpush.bf16.msra.mxu0 0
        %509 = vmatpush.bf16.msra.mxu0 %v481
        %510 = vmatmul.bf16.gmra.mxu0 %v475
        %v511 = vpop.f32.mrf.mxu0
        %v512 = vadd.f32 0.0, %v511
        %v513 = vpop.f32.mrf.mxu0
        %514 = vdwg.mxu0
        %515 = vmatpush.bf16.msra.mxu0 0
        %516 = vmatpush.bf16.msra.mxu0 0
        %517 = vmatpush.bf16.msra.mxu0 0
        %518 = vmatpush.bf16.msra.mxu0 0
        %519 = vmatpush.bf16.msra.mxu0 0
        %520 = vmatpush.bf16.msra.mxu0 0
        %521 = vmatpush.bf16.msra.mxu0 0
        %522 = vmatpush.bf16.msra.mxu0 %v484
        %523 = vmatmul.bf16.gmra.mxu0 %v475
        %v524 = vpop.f32.mrf.mxu0
        %v525 = vadd.f32 0.0, %v524
        %v526 = vpop.f32.mrf.mxu0
        %527 = vdwg.mxu0
        %528 = vmatpush.bf16.msra.mxu0 0
        %529 = vmatpush.bf16.msra.mxu0 0
        %530 = vmatpush.bf16.msra.mxu0 0
        %531 = vmatpush.bf16.msra.mxu0 0
        %532 = vmatpush.bf16.msra.mxu0 0
        %533 = vmatpush.bf16.msra.mxu0 0
        %534 = vmatpush.bf16.msra.mxu0 0
        %535 = vmatpush.bf16.msra.mxu0 %v487
        %536 = vmatmul.bf16.gmra.mxu0 %v475
        %v537 = vpop.f32.mrf.mxu0
        %v538 = vadd.f32 0.0, %v537
        %v539 = vpop.f32.mrf.mxu0
        %540 = vdwg.mxu0
        %v541 = vadd.f32 %v402, %v499
        %v542 = vadd.f32 %v415, %v512
        %v543 = vadd.f32 %v428, %v525
        %v544 = vadd.f32 %v441, %v538
        %s545 = scalar_lea.vmem %s1, 12
        %v546 = vld [vmem:[%s545] sm:$0xf]
        %547 = vst [vmem:[#allocation1] ss:$4 sm:$0xff] %v272
        %s548 = scalar_lea.vmem [#allocation1], 32
        %549 = vst [vmem:[%s548] ss:$4 sm:$0xff] %v273
        %v550 = vld.sshfl [vmem:[#allocation1] sm:$0xff pattern:$0x73625140]
        %v552 = vld.sshfl [vmem:[#allocation1 + $0x8] sm:$0xff pattern:$0x73625140]
        %v554 = vld.sshfl [vmem:[#allocation1 + $0x10] sm:$0xff pattern:$0x73625140]
        %v556 = vld.sshfl [vmem:[#allocation1 + $0x18] sm:$0xff pattern:$0x73625140]
        %v558 = vld.sshfl [vmem:[#allocation1 + $0x20] sm:$0xff pattern:$0x73625140]
        %560 = vrot.lane.b32.xlu0 %v550, 108
        %v561 = vpop.permute.xlu0 %560
        %562 = vrot.lane.b32.xlu0 %v552, 108
        %v563 = vpop.permute.xlu0 %562
        %564 = vrot.lane.b32.xlu0 %v554, 108
        %v565 = vpop.permute.xlu0 %564
        %566 = vrot.lane.b32.xlu0 %v556, 108
        %v567 = vpop.permute.xlu0 %566
        %568 = vrot.lane.b32.xlu0 %v558, 108
        %v569 = vpop.permute.xlu0 %568
        %vm570 = vcmask 883712
        %v571 = vsel %vm570, %v561, %v563
        %v572 = vsel %vm570, %v563, %v565
        %v573 = vsel %vm570, %v565, %v567
        %v574 = vsel %vm570, %v567, %v569
        %v576 = vsel %vm307, %v546, 0
        %v579 = vsel %vm311, %v571, 0
        %v582 = vsel %vm311, %v572, 0
        %v585 = vsel %vm311, %v573, 0
        %v588 = vsel %vm311, %v574, 0
        %590 = vmatpush.bf16.msra.mxu0 0
        %591 = vmatpush.bf16.msra.mxu0 0
        %592 = vmatpush.bf16.msra.mxu0 0
        %593 = vmatpush.bf16.msra.mxu0 0
        %594 = vmatpush.bf16.msra.mxu0 0
        %595 = vmatpush.bf16.msra.mxu0 0
        %596 = vmatpush.bf16.msra.mxu0 0
        %597 = vmatpush.bf16.msra.mxu0 %v579
        %598 = vmatmul.bf16.gmra.mxu0 %v576
        %v599 = vpop.f32.mrf.mxu0
        %v600 = vadd.f32 0.0, %v599
        %v601 = vpop.f32.mrf.mxu0
        %602 = vdwg.mxu0
        %603 = vmatpush.bf16.msra.mxu0 0
        %604 = vmatpush.bf16.msra.mxu0 0
        %605 = vmatpush.bf16.msra.mxu0 0
        %606 = vmatpush.bf16.msra.mxu0 0
        %607 = vmatpush.bf16.msra.mxu0 0
        %608 = vmatpush.bf16.msra.mxu0 0
        %609 = vmatpush.bf16.msra.mxu0 0
        %610 = vmatpush.bf16.msra.mxu0 %v582
        %611 = vmatmul.bf16.gmra.mxu0 %v576
        %v612 = vpop.f32.mrf.mxu0
        %v613 = vadd.f32 0.0, %v612
        %v614 = vpop.f32.mrf.mxu0
        %615 = vdwg.mxu0
        %616 = vmatpush.bf16.msra.mxu0 0
        %617 = vmatpush.bf16.msra.mxu0 0
        %618 = vmatpush.bf16.msra.mxu0 0
        %619 = vmatpush.bf16.msra.mxu0 0
        %620 = vmatpush.bf16.msra.mxu0 0
        %621 = vmatpush.bf16.msra.mxu0 0
        %622 = vmatpush.bf16.msra.mxu0 0
        %623 = vmatpush.bf16.msra.mxu0 %v585
        %624 = vmatmul.bf16.gmra.mxu0 %v576
        %v625 = vpop.f32.mrf.mxu0
        %v626 = vadd.f32 0.0, %v625
        %v627 = vpop.f32.mrf.mxu0
        %628 = vdwg.mxu0
        %629 = vmatpush.bf16.msra.mxu0 0
        %630 = vmatpush.bf16.msra.mxu0 0
        %631 = vmatpush.bf16.msra.mxu0 0
        %632 = vmatpush.bf16.msra.mxu0 0
        %633 = vmatpush.bf16.msra.mxu0 0
        %634 = vmatpush.bf16.msra.mxu0 0
        %635 = vmatpush.bf16.msra.mxu0 0
        %636 = vmatpush.bf16.msra.mxu0 %v588
        %637 = vmatmul.bf16.gmra.mxu0 %v576
        %v638 = vpop.f32.mrf.mxu0
        %v639 = vadd.f32 0.0, %v638
        %v640 = vpop.f32.mrf.mxu0
        %641 = vdwg.mxu0
        %v642 = vadd.f32 %v541, %v600
        %v643 = vadd.f32 %v542, %v613
        %v644 = vadd.f32 %v543, %v626
        %v645 = vadd.f32 %v544, %v639
        %s646 = scalar_lea.vmem %s1, 16
        %v647 = vld [vmem:[%s646] sm:$0xf]
        %648 = vst [vmem:[#allocation1] ss:$4 sm:$0xff] %v272
        %s649 = scalar_lea.vmem [#allocation1], 32
        %650 = vst [vmem:[%s649] ss:$4 sm:$0xff] %v273
        %v651 = vld.sshfl [vmem:[#allocation1] sm:$0xff pattern:$0x73625140]
        %v653 = vld.sshfl [vmem:[#allocation1 + $0x8] sm:$0xff pattern:$0x73625140]
        %v655 = vld.sshfl [vmem:[#allocation1 + $0x10] sm:$0xff pattern:$0x73625140]
        %v657 = vld.sshfl [vmem:[#allocation1 + $0x18] sm:$0xff pattern:$0x73625140]
        %v659 = vld.sshfl [vmem:[#allocation1 + $0x20] sm:$0xff pattern:$0x73625140]
        %661 = vrot.lane.b32.xlu0 %v651, 107
        %v662 = vpop.permute.xlu0 %661
        %663 = vrot.lane.b32.xlu0 %v653, 107
        %v664 = vpop.permute.xlu0 %663
        %665 = vrot.lane.b32.xlu0 %v655, 107
        %v666 = vpop.permute.xlu0 %665
        %667 = vrot.lane.b32.xlu0 %v657, 107
        %v668 = vpop.permute.xlu0 %667
        %669 = vrot.lane.b32.xlu0 %v659, 107
        %v670 = vpop.permute.xlu0 %669
        %vm671 = vcmask 875520
        %v672 = vsel %vm671, %v662, %v664
        %v673 = vsel %vm671, %v664, %v666
        %v674 = vsel %vm671, %v666, %v668
        %v675 = vsel %vm671, %v668, %v670
        %v677 = vsel %vm307, %v647, 0
        %v680 = vsel %vm311, %v672, 0
        %v683 = vsel %vm311, %v673, 0
        %v686 = vsel %vm311, %v674, 0
        %v689 = vsel %vm311, %v675, 0
        %691 = vmatpush.bf16.msra.mxu0 0
        %692 = vmatpush.bf16.msra.mxu0 0
        %693 = vmatpush.bf16.msra.mxu0 0
        %694 = vmatpush.bf16.msra.mxu0 0
        %695 = vmatpush.bf16.msra.mxu0 0
        %696 = vmatpush.bf16.msra.mxu0 0
        %697 = vmatpush.bf16.msra.mxu0 0
        %698 = vmatpush.bf16.msra.mxu0 %v680
        %699 = vmatmul.bf16.gmra.mxu0 %v677
        %v700 = vpop.f32.mrf.mxu0
        %v701 = vadd.f32 0.0, %v700
        %v702 = vpop.f32.mrf.mxu0
        %703 = vdwg.mxu0
        %704 = vmatpush.bf16.msra.mxu0 0
        %705 = vmatpush.bf16.msra.mxu0 0
        %706 = vmatpush.bf16.msra.mxu0 0
        %707 = vmatpush.bf16.msra.mxu0 0
        %708 = vmatpush.bf16.msra.mxu0 0
        %709 = vmatpush.bf16.msra.mxu0 0
        %710 = vmatpush.bf16.msra.mxu0 0
        %711 = vmatpush.bf16.msra.mxu0 %v683
        %712 = vmatmul.bf16.gmra.mxu0 %v677
        %v713 = vpop.f32.mrf.mxu0
        %v714 = vadd.f32 0.0, %v713
        %v715 = vpop.f32.mrf.mxu0
        %716 = vdwg.mxu0
        %717 = vmatpush.bf16.msra.mxu0 0
        %718 = vmatpush.bf16.msra.mxu0 0
        %719 = vmatpush.bf16.msra.mxu0 0
        %720 = vmatpush.bf16.msra.mxu0 0
        %721 = vmatpush.bf16.msra.mxu0 0
        %722 = vmatpush.bf16.msra.mxu0 0
        %723 = vmatpush.bf16.msra.mxu0 0
        %724 = vmatpush.bf16.msra.mxu0 %v686
        %725 = vmatmul.bf16.gmra.mxu0 %v677
        %v726 = vpop.f32.mrf.mxu0
        %v727 = vadd.f32 0.0, %v726
        %v728 = vpop.f32.mrf.mxu0
        %729 = vdwg.mxu0
        %730 = vmatpush.bf16.msra.mxu0 0
        %731 = vmatpush.bf16.msra.mxu0 0
        %732 = vmatpush.bf16.msra.mxu0 0
        %733 = vmatpush.bf16.msra.mxu0 0
        %734 = vmatpush.bf16.msra.mxu0 0
        %735 = vmatpush.bf16.msra.mxu0 0
        %736 = vmatpush.bf16.msra.mxu0 0
        %737 = vmatpush.bf16.msra.mxu0 %v689
        %738 = vmatmul.bf16.gmra.mxu0 %v677
        %v739 = vpop.f32.mrf.mxu0
        %v740 = vadd.f32 0.0, %v739
        %v741 = vpop.f32.mrf.mxu0
        %742 = vdwg.mxu0
        %v743 = vadd.f32 %v642, %v701
        %v744 = vadd.f32 %v643, %v714
        %v745 = vadd.f32 %v644, %v727
        %v746 = vadd.f32 %v645, %v740
        %s747 = scalar_lea.vmem %s1, 20
        %v748 = vld [vmem:[%s747] sm:$0xf]
        %749 = vst [vmem:[#allocation1] ss:$4 sm:$0xff] %v272
        %s750 = scalar_lea.vmem [#allocation1], 32
        %751 = vst [vmem:[%s750] ss:$4 sm:$0xff] %v273
        %v752 = vld.sshfl [vmem:[#allocation1] sm:$0xff pattern:$0x73625140]
        %v754 = vld.sshfl [vmem:[#allocation1 + $0x8] sm:$0xff pattern:$0x73625140]
        %v756 = vld.sshfl [vmem:[#allocation1 + $0x10] sm:$0xff pattern:$0x73625140]
        %v758 = vld.sshfl [vmem:[#allocation1 + $0x18] sm:$0xff pattern:$0x73625140]
        %v760 = vld.sshfl [vmem:[#allocation1 + $0x20] sm:$0xff pattern:$0x73625140]
        %762 = vrot.lane.b32.xlu0 %v752, 106
        %v763 = vpop.permute.xlu0 %762
        %764 = vrot.lane.b32.xlu0 %v754, 106
        %v765 = vpop.permute.xlu0 %764
        %766 = vrot.lane.b32.xlu0 %v756, 106
        %v767 = vpop.permute.xlu0 %766
        %768 = vrot.lane.b32.xlu0 %v758, 106
        %v769 = vpop.permute.xlu0 %768
        %770 = vrot.lane.b32.xlu0 %v760, 106
        %v771 = vpop.permute.xlu0 %770
        %vm772 = vcmask 867328
        %v773 = vsel %vm772, %v763, %v765
        %v774 = vsel %vm772, %v765, %v767
        %v775 = vsel %vm772, %v767, %v769
        %v776 = vsel %vm772, %v769, %v771
        %v778 = vsel %vm307, %v748, 0
        %v781 = vsel %vm311, %v773, 0
        %v784 = vsel %vm311, %v774, 0
        %v787 = vsel %vm311, %v775, 0
        %v790 = vsel %vm311, %v776, 0
        %792 = vmatpush.bf16.msra.mxu0 0
        %793 = vmatpush.bf16.msra.mxu0 0
        %794 = vmatpush.bf16.msra.mxu0 0
        %795 = vmatpush.bf16.msra.mxu0 0
        %796 = vmatpush.bf16.msra.mxu0 0
        %797 = vmatpush.bf16.msra.mxu0 0
        %798 = vmatpush.bf16.msra.mxu0 0
        %799 = vmatpush.bf16.msra.mxu0 %v781
        %800 = vmatmul.bf16.gmra.mxu0 %v778
        %v801 = vpop.f32.mrf.mxu0
        %v802 = vadd.f32 0.0, %v801
        %v803 = vpop.f32.mrf.mxu0
        %804 = vdwg.mxu0
        %805 = vmatpush.bf16.msra.mxu0 0
        %806 = vmatpush.bf16.msra.mxu0 0
        %807 = vmatpush.bf16.msra.mxu0 0
        %808 = vmatpush.bf16.msra.mxu0 0
        %809 = vmatpush.bf16.msra.mxu0 0
        %810 = vmatpush.bf16.msra.mxu0 0
        %811 = vmatpush.bf16.msra.mxu0 0
        %812 = vmatpush.bf16.msra.mxu0 %v784
        %813 = vmatmul.bf16.gmra.mxu0 %v778
        %v814 = vpop.f32.mrf.mxu0
        %v815 = vadd.f32 0.0, %v814
        %v816 = vpop.f32.mrf.mxu0
        %817 = vdwg.mxu0
        %818 = vmatpush.bf16.msra.mxu0 0
        %819 = vmatpush.bf16.msra.mxu0 0
        %820 = vmatpush.bf16.msra.mxu0 0
        %821 = vmatpush.bf16.msra.mxu0 0
        %822 = vmatpush.bf16.msra.mxu0 0
        %823 = vmatpush.bf16.msra.mxu0 0
        %824 = vmatpush.bf16.msra.mxu0 0
        %825 = vmatpush.bf16.msra.mxu0 %v787
        %826 = vmatmul.bf16.gmra.mxu0 %v778
        %v827 = vpop.f32.mrf.mxu0
        %v828 = vadd.f32 0.0, %v827
        %v829 = vpop.f32.mrf.mxu0
        %830 = vdwg.mxu0
        %831 = vmatpush.bf16.msra.mxu0 0
        %832 = vmatpush.bf16.msra.mxu0 0
        %833 = vmatpush.bf16.msra.mxu0 0
        %834 = vmatpush.bf16.msra.mxu0 0
        %835 = vmatpush.bf16.msra.mxu0 0
        %836 = vmatpush.bf16.msra.mxu0 0
        %837 = vmatpush.bf16.msra.mxu0 0
        %838 = vmatpush.bf16.msra.mxu0 %v790
        %839 = vmatmul.bf16.gmra.mxu0 %v778
        %v840 = vpop.f32.mrf.mxu0
        %v841 = vadd.f32 0.0, %v840
        %v842 = vpop.f32.mrf.mxu0
        %843 = vdwg.mxu0
        %v844 = vadd.f32 %v743, %v802
        %v845 = vadd.f32 %v744, %v815
        %v846 = vadd.f32 %v745, %v828
        %v847 = vadd.f32 %v746, %v841
        %s848 = scalar_lea.vmem %s1, 24
        %v849 = vld [vmem:[%s848] sm:$0xf]
        %850 = vst [vmem:[#allocation1] ss:$4 sm:$0xff] %v272
        %s851 = scalar_lea.vmem [#allocation1], 32
        %852 = vst [vmem:[%s851] ss:$4 sm:$0xff] %v273
        %v853 = vld.sshfl [vmem:[#allocation1] sm:$0xff pattern:$0x73625140]
        %v855 = vld.sshfl [vmem:[#allocation1 + $0x8] sm:$0xff pattern:$0x73625140]
        %v857 = vld.sshfl [vmem:[#allocation1 + $0x10] sm:$0xff pattern:$0x73625140]
        %v859 = vld.sshfl [vmem:[#allocation1 + $0x18] sm:$0xff pattern:$0x73625140]
        %v861 = vld.sshfl [vmem:[#allocation1 + $0x20] sm:$0xff pattern:$0x73625140]
        %863 = vrot.lane.b32.xlu0 %v853, 88
        %v864 = vpop.permute.xlu0 %863
        %865 = vrot.lane.b32.xlu0 %v855, 88
        %v866 = vpop.permute.xlu0 %865
        %867 = vrot.lane.b32.xlu0 %v857, 88
        %v868 = vpop.permute.xlu0 %867
        %869 = vrot.lane.b32.xlu0 %v859, 88
        %v870 = vpop.permute.xlu0 %869
        %871 = vrot.lane.b32.xlu0 %v861, 88
        %v872 = vpop.permute.xlu0 %871
        %vm873 = vcmask 719872
        %v874 = vsel %vm873, %v864, %v866
        %v875 = vsel %vm873, %v866, %v868
        %v876 = vsel %vm873, %v868, %v870
        %v877 = vsel %vm873, %v870, %v872
        %v879 = vsel %vm307, %v849, 0
        %v882 = vsel %vm311, %v874, 0
        %v885 = vsel %vm311, %v875, 0
        %v888 = vsel %vm311, %v876, 0
        %v891 = vsel %vm311, %v877, 0
        %893 = vmatpush.bf16.msra.mxu0 0
        %894 = vmatpush.bf16.msra.mxu0 0
        %895 = vmatpush.bf16.msra.mxu0 0
        %896 = vmatpush.bf16.msra.mxu0 0
        %897 = vmatpush.bf16.msra.mxu0 0
        %898 = vmatpush.bf16.msra.mxu0 0
        %899 = vmatpush.bf16.msra.mxu0 0
        %900 = vmatpush.bf16.msra.mxu0 %v882
        %901 = vmatmul.bf16.gmra.mxu0 %v879
        %v902 = vpop.f32.mrf.mxu0
        %v903 = vadd.f32 0.0, %v902
        %v904 = vpop.f32.mrf.mxu0
        %905 = vdwg.mxu0
        %906 = vmatpush.bf16.msra.mxu0 0
        %907 = vmatpush.bf16.msra.mxu0 0
        %908 = vmatpush.bf16.msra.mxu0 0
        %909 = vmatpush.bf16.msra.mxu0 0
        %910 = vmatpush.bf16.msra.mxu0 0
        %911 = vmatpush.bf16.msra.mxu0 0
        %912 = vmatpush.bf16.msra.mxu0 0
        %913 = vmatpush.bf16.msra.mxu0 %v885
        %914 = vmatmul.bf16.gmra.mxu0 %v879
        %v915 = vpop.f32.mrf.mxu0
        %v916 = vadd.f32 0.0, %v915
        %v917 = vpop.f32.mrf.mxu0
        %918 = vdwg.mxu0
        %919 = vmatpush.bf16.msra.mxu0 0
        %920 = vmatpush.bf16.msra.mxu0 0
        %921 = vmatpush.bf16.msra.mxu0 0
        %922 = vmatpush.bf16.msra.mxu0 0
        %923 = vmatpush.bf16.msra.mxu0 0
        %924 = vmatpush.bf16.msra.mxu0 0
        %925 = vmatpush.bf16.msra.mxu0 0
        %926 = vmatpush.bf16.msra.mxu0 %v888
        %927 = vmatmul.bf16.gmra.mxu0 %v879
        %v928 = vpop.f32.mrf.mxu0
        %v929 = vadd.f32 0.0, %v928
        %v930 = vpop.f32.mrf.mxu0
        %931 = vdwg.mxu0
        %932 = vmatpush.bf16.msra.mxu0 0
        %933 = vmatpush.bf16.msra.mxu0 0
        %934 = vmatpush.bf16.msra.mxu0 0
        %935 = vmatpush.bf16.msra.mxu0 0
        %936 = vmatpush.bf16.msra.mxu0 0
        %937 = vmatpush.bf16.msra.mxu0 0
        %938 = vmatpush.bf16.msra.mxu0 0
        %939 = vmatpush.bf16.msra.mxu0 %v891
        %940 = vmatmul.bf16.gmra.mxu0 %v879
        %v941 = vpop.f32.mrf.mxu0
        %v942 = vadd.f32 0.0, %v941
        %v943 = vpop.f32.mrf.mxu0
        %944 = vdwg.mxu0
        %v945 = vadd.f32 %v844, %v903
        %v946 = vadd.f32 %v845, %v916
        %v947 = vadd.f32 %v846, %v929
        %v948 = vadd.f32 %v847, %v942
        %s949 = scalar_lea.vmem %s1, 28
        %v950 = vld [vmem:[%s949] sm:$0xf]
        %951 = vst [vmem:[#allocation1] ss:$4 sm:$0xff] %v272
        %s952 = scalar_lea.vmem [#allocation1], 32
        %953 = vst [vmem:[%s952] ss:$4 sm:$0xff] %v273
        %v954 = vld.sshfl [vmem:[#allocation1] sm:$0xff pattern:$0x73625140]
        %v956 = vld.sshfl [vmem:[#allocation1 + $0x8] sm:$0xff pattern:$0x73625140]
        %v958 = vld.sshfl [vmem:[#allocation1 + $0x10] sm:$0xff pattern:$0x73625140]
        %v960 = vld.sshfl [vmem:[#allocation1 + $0x18] sm:$0xff pattern:$0x73625140]
        %v962 = vld.sshfl [vmem:[#allocation1 + $0x20] sm:$0xff pattern:$0x73625140]
        %964 = vrot.lane.b32.xlu0 %v954, 87
        %v965 = vpop.permute.xlu0 %964
        %966 = vrot.lane.b32.xlu0 %v956, 87
        %v967 = vpop.permute.xlu0 %966
        %968 = vrot.lane.b32.xlu0 %v958, 87
        %v969 = vpop.permute.xlu0 %968
        %970 = vrot.lane.b32.xlu0 %v960, 87
        %v971 = vpop.permute.xlu0 %970
        %972 = vrot.lane.b32.xlu0 %v962, 87
        %v973 = vpop.permute.xlu0 %972
        %vm974 = vcmask 711680
        %v975 = vsel %vm974, %v965, %v967
        %v976 = vsel %vm974, %v967, %v969
        %v977 = vsel %vm974, %v969, %v971
        %v978 = vsel %vm974, %v971, %v973
        %v980 = vsel %vm307, %v950, 0
        %v983 = vsel %vm311, %v975, 0
        %v986 = vsel %vm311, %v976, 0
        %v989 = vsel %vm311, %v977, 0
        %v992 = vsel %vm311, %v978, 0
        %994 = vmatpush.bf16.msra.mxu0 0
        %995 = vmatpush.bf16.msra.mxu0 0
        %996 = vmatpush.bf16.msra.mxu0 0
        %997 = vmatpush.bf16.msra.mxu0 0
        %998 = vmatpush.bf16.msra.mxu0 0
        %999 = vmatpush.bf16.msra.mxu0 0
        %1000 = vmatpush.bf16.msra.mxu0 0
        %1001 = vmatpush.bf16.msra.mxu0 %v983
        %1002 = vmatmul.bf16.gmra.mxu0 %v980
        %v1003 = vpop.f32.mrf.mxu0
        %v1004 = vadd.f32 0.0, %v1003
        %v1005 = vpop.f32.mrf.mxu0
        %1006 = vdwg.mxu0
        %1007 = vmatpush.bf16.msra.mxu0 0
        %1008 = vmatpush.bf16.msra.mxu0 0
        %1009 = vmatpush.bf16.msra.mxu0 0
        %1010 = vmatpush.bf16.msra.mxu0 0
        %1011 = vmatpush.bf16.msra.mxu0 0
        %1012 = vmatpush.bf16.msra.mxu0 0
        %1013 = vmatpush.bf16.msra.mxu0 0
        %1014 = vmatpush.bf16.msra.mxu0 %v986
        %1015 = vmatmul.bf16.gmra.mxu0 %v980
        %v1016 = vpop.f32.mrf.mxu0
        %v1017 = vadd.f32 0.0, %v1016
        %v1018 = vpop.f32.mrf.mxu0
        %1019 = vdwg.mxu0
        %1020 = vmatpush.bf16.msra.mxu0 0
        %1021 = vmatpush.bf16.msra.mxu0 0
        %1022 = vmatpush.bf16.msra.mxu0 0
        %1023 = vmatpush.bf16.msra.mxu0 0
        %1024 = vmatpush.bf16.msra.mxu0 0
        %1025 = vmatpush.bf16.msra.mxu0 0
        %1026 = vmatpush.bf16.msra.mxu0 0
        %1027 = vmatpush.bf16.msra.mxu0 %v989
        %1028 = vmatmul.bf16.gmra.mxu0 %v980
        %v1029 = vpop.f32.mrf.mxu0
        %v1030 = vadd.f32 0.0, %v1029
        %v1031 = vpop.f32.mrf.mxu0
        %1032 = vdwg.mxu0
        %1033 = vmatpush.bf16.msra.mxu0 0
        %1034 = vmatpush.bf16.msra.mxu0 0
        %1035 = vmatpush.bf16.msra.mxu0 0
        %1036 = vmatpush.bf16.msra.mxu0 0
        %1037 = vmatpush.bf16.msra.mxu0 0
        %1038 = vmatpush.bf16.msra.mxu0 0
        %1039 = vmatpush.bf16.msra.mxu0 0
        %1040 = vmatpush.bf16.msra.mxu0 %v992
        %1041 = vmatmul.bf16.gmra.mxu0 %v980
        %v1042 = vpop.f32.mrf.mxu0
        %v1043 = vadd.f32 0.0, %v1042
        %v1044 = vpop.f32.mrf.mxu0
        %1045 = vdwg.mxu0
        %v1046 = vadd.f32 %v945, %v1004
        %v1047 = vadd.f32 %v946, %v1017
        %v1048 = vadd.f32 %v947, %v1030
        %v1049 = vadd.f32 %v948, %v1043
        %s1050 = scalar_lea.vmem %s1, 32
        %v1051 = vld [vmem:[%s1050] sm:$0xf]
        %1052 = vst [vmem:[#allocation1] ss:$4 sm:$0xff] %v272
        %s1053 = scalar_lea.vmem [#allocation1], 32
        %1054 = vst [vmem:[%s1053] ss:$4 sm:$0xff] %v273
        %v1055 = vld.sshfl [vmem:[#allocation1] sm:$0xff pattern:$0x73625140]
        %v1057 = vld.sshfl [vmem:[#allocation1 + $0x8] sm:$0xff pattern:$0x73625140]
        %v1059 = vld.sshfl [vmem:[#allocation1 + $0x10] sm:$0xff pattern:$0x73625140]
        %v1061 = vld.sshfl [vmem:[#allocation1 + $0x18] sm:$0xff pattern:$0x73625140]
        %v1063 = vld.sshfl [vmem:[#allocation1 + $0x20] sm:$0xff pattern:$0x73625140]
        %1065 = vrot.lane.b32.xlu0 %v1055, 86
        %v1066 = vpop.permute.xlu0 %1065
        %1067 = vrot.lane.b32.xlu0 %v1057, 86
        %v1068 = vpop.permute.xlu0 %1067
        %1069 = vrot.lane.b32.xlu0 %v1059, 86
        %v1070 = vpop.permute.xlu0 %1069
        %1071 = vrot.lane.b32.xlu0 %v1061, 86
        %v1072 = vpop.permute.xlu0 %1071
        %1073 = vrot.lane.b32.xlu0 %v1063, 86
        %v1074 = vpop.permute.xlu0 %1073
        %vm1075 = vcmask 703488
        %v1076 = vsel %vm1075, %v1066, %v1068
        %v1077 = vsel %vm1075, %v1068, %v1070
        %v1078 = vsel %vm1075, %v1070, %v1072
        %v1079 = vsel %vm1075, %v1072, %v1074
        %v1081 = vsel %vm307, %v1051, 0
        %v1084 = vsel %vm311, %v1076, 0
        %v1087 = vsel %vm311, %v1077, 0
        %v1090 = vsel %vm311, %v1078, 0
        %v1093 = vsel %vm311, %v1079, 0
        %1095 = vmatpush.bf16.msra.mxu0 0
        %1096 = vmatpush.bf16.msra.mxu0 0
        %1097 = vmatpush.bf16.msra.mxu0 0
        %1098 = vmatpush.bf16.msra.mxu0 0
        %1099 = vmatpush.bf16.msra.mxu0 0
        %1100 = vmatpush.bf16.msra.mxu0 0
        %1101 = vmatpush.bf16.msra.mxu0 0
        %1102 = vmatpush.bf16.msra.mxu0 %v1084
        %1103 = vmatmul.bf16.gmra.mxu0 %v1081
        %v1104 = vpop.f32.mrf.mxu0
        %v1105 = vadd.f32 0.0, %v1104
        %v1106 = vpop.f32.mrf.mxu0
        %1107 = vdwg.mxu0
        %1108 = vmatpush.bf16.msra.mxu0 0
        %1109 = vmatpush.bf16.msra.mxu0 0
        %1110 = vmatpush.bf16.msra.mxu0 0
        %1111 = vmatpush.bf16.msra.mxu0 0
        %1112 = vmatpush.bf16.msra.mxu0 0
        %1113 = vmatpush.bf16.msra.mxu0 0
        %1114 = vmatpush.bf16.msra.mxu0 0
        %1115 = vmatpush.bf16.msra.mxu0 %v1087
        %1116 = vmatmul.bf16.gmra.mxu0 %v1081
        %v1117 = vpop.f32.mrf.mxu0
        %v1118 = vadd.f32 0.0, %v1117
        %v1119 = vpop.f32.mrf.mxu0
        %1120 = vdwg.mxu0
        %1121 = vmatpush.bf16.msra.mxu0 0
        %1122 = vmatpush.bf16.msra.mxu0 0
        %1123 = vmatpush.bf16.msra.mxu0 0
        %1124 = vmatpush.bf16.msra.mxu0 0
        %1125 = vmatpush.bf16.msra.mxu0 0
        %1126 = vmatpush.bf16.msra.mxu0 0
        %1127 = vmatpush.bf16.msra.mxu0 0
        %1128 = vmatpush.bf16.msra.mxu0 %v1090
        %1129 = vmatmul.bf16.gmra.mxu0 %v1081
        %v1130 = vpop.f32.mrf.mxu0
        %v1131 = vadd.f32 0.0, %v1130
        %v1132 = vpop.f32.mrf.mxu0
        %1133 = vdwg.mxu0
        %1134 = vmatpush.bf16.msra.mxu0 0
        %1135 = vmatpush.bf16.msra.mxu0 0
        %1136 = vmatpush.bf16.msra.mxu0 0
        %1137 = vmatpush.bf16.msra.mxu0 0
        %1138 = vmatpush.bf16.msra.mxu0 0
        %1139 = vmatpush.bf16.msra.mxu0 0
        %1140 = vmatpush.bf16.msra.mxu0 0
        %1141 = vmatpush.bf16.msra.mxu0 %v1093
        %1142 = vmatmul.bf16.gmra.mxu0 %v1081
        %v1143 = vpop.f32.mrf.mxu0
        %v1144 = vadd.f32 0.0, %v1143
        %v1145 = vpop.f32.mrf.mxu0
        %1146 = vdwg.mxu0
        %v1147 = vadd.f32 %v1046, %v1105
        %v1148 = vadd.f32 %v1047, %v1118
        %v1149 = vadd.f32 %v1048, %v1131
        %v1150 = vadd.f32 %v1049, %v1144
        %v1151 = vld [vmem:[%s2] sm:$0xff]
        %1153 = vset.pattern.permute.xlu0 0
        %1154 = vperm.xlu0 %1153, %v1151
        %v1155 = vpop.permute.xlu0 %1154
        %v1157 = vadd.f32 %v1147, %v1155
        %v1158 = vadd.f32 %v1148, %v1155
        %v1159 = vadd.f32 %v1149, %v1155
        %v1160 = vadd.f32 %v1150, %v1155
        %v1161 = vmax.f32 %v1157, 0.0
        %v1162 = vmax.f32 %v1158, 0.0
        %v1163 = vmax.f32 %v1159, 0.0
        %v1164 = vmax.f32 %v1160, 0.0
        %1165 = vst [vmem:[%s245] sm:$0xff] %v1161
        %1166 = vst [vmem:[%s245 + $0x8] sm:$0xff] %v1162
        %1167 = vst [vmem:[%s245 + $0x10] sm:$0xff] %v1163
        %1168 = vst [vmem:[%s245 + $0x18] sm:$0xff] %v1164
        %v1169 = vld [vmem:[%s3] sm:$0xf]
        %v1171 = vperm.slane %v1169, 0
        %v1172 = vperm.slane %v1169, 1
        %v1173 = vperm.slane %v1169, 2
        %v1174 = vperm.slane %v1169, 3
        %v1179 = vmul.f32 %v1161, %v1171
        %v1180 = vmul.f32 %v1162, %v1172
        %v1181 = vmul.f32 %v1163, %v1173
        %v1182 = vmul.f32 %v1164, %v1174
        %v1183 = vadd.f32 %v1179, %v1180
        %v1184 = vadd.f32 %v1183, %v1181
        %v1185 = vadd.f32 %v1184, %v1182
        %1186 = vadd.xlane.f32.xlu0 %v1185
        %v1187 = vpop.xlane.xlu0 %1186
        %vm1188 = vcmask 7168
        %1189 = vst.msk [vmem:[%s266] sm:$0xff] %vm1188, %v1187
        %v1190 = vmul.f32 %v1179, %v1179
        %v1191 = vmul.f32 %v1180, %v1180
        %v1192 = vmul.f32 %v1181, %v1181
        %v1193 = vmul.f32 %v1182, %v1182
        %v1194 = vadd.f32 %v1190, %v1191
        %v1195 = vadd.f32 %v1194, %v1192
        %v1196 = vadd.f32 %v1195, %v1193
        %1197 = vadd.xlane.f32.xlu0 %v1196
        %v1198 = vpop.xlane.xlu0 %1197
        %1199 = vst.msk [vmem:[%s270] sm:$0xff] %vm1188, %v1198
        %s1200 = sand.u32 %s118, 1
        %s1201 = scalar_lea.sflag [#allocation3], %s1200
        %s1202 = sand.u32 %s118, 1
        %s1203 = smul.addr %s1202, 32
        %s1204 = scalar_lea.vmem [#allocation2], %s1203
        %p1205 = scmp.lt.s32.totalorder %s21, 1
        %s1206 = scalar_select %p1205, %s21, 1
        %s1207 = smul.addr %s1206, 8
        %s1208 = scalar_lea.vmem %s5, %s1207
        %p1209 = scmp.lt.s32.totalorder %s21, 1
        %s1210 = scalar_select %p1209, %s21, 1
        %s1211 = smul.addr %s1210, 8
        %s1212 = scalar_lea.vmem %s6, %s1211
        // Predicated region
        $region37: #{tpu_custom_call.1} parent=35 // pred_check
          %p1213 = pneg %p128
        $region38: #{tpu_custom_call.1} parent=35 // pred_check_branch
          %1215 = sbr.rel (%p1213) target = $region40
        $region39: #{tpu_custom_call.1} parent=35 // pred_region
          %1217 = vsyncadd %s1201, 0
          %s1218 = smul.addr %s21, 4
          %s1219 = smul.addr %s1218, 8
          %s1220 = scalar_lea.hbm %s4, %s1219
          %s1222 = sshll.u32 %s1204, 4
          %s1223 = int_to_ptr.vmem [resolvable:$true] %s1222
          %s1224 = sshll.u32 %s1220, 4
          %s1225 = int_to_ptr.hbm [resolvable:$true] %s1224
          %1227 = dma.vmem_to_hbm [thread:$0]  %s1223, 512, %s1225, %s1201
        $region40: #{tpu_custom_call.1} parent=35 // pred_fallthru
          _
        // Predicated region
        $region41: #{tpu_custom_call.1} parent=35 // pred_check
          %p1228 = pneg %p154
        $region42: #{tpu_custom_call.1} parent=35 // pred_check_branch
          %1230 = sbr.rel (%p1228) target = $region44
        $region43: #{tpu_custom_call.1} parent=35 // pred_region
          _
        $region44: #{tpu_custom_call.1} parent=35 // pred_fallthru
          _
        // Predicated region
        $region45: #{tpu_custom_call.1} parent=35 // pred_check
          %p1231 = pneg %p180
        $region46: #{tpu_custom_call.1} parent=35 // pred_check_branch
          %1233 = sbr.rel (%p1231) target = $region48
        $region47: #{tpu_custom_call.1} parent=35 // pred_region
          _
        $region48: #{tpu_custom_call.1} parent=35 // pred_fallthru
          _
      $region36: #{tpu_custom_call.1} parent=5 // pred_fallthru
        _
      %p1234 = scmp.le.s32.totalorder 2, %s16
      // Predicated region
      $region49: #{tpu_custom_call.1} parent=5 // pred_check
        %p1235 = pneg %p1234
      $region50: #{tpu_custom_call.1} parent=5 // pred_check_branch
        %1237 = sbr.rel (%p1235) target = $region52
      $region51: #{tpu_custom_call.1} parent=5 // pred_region
        %s1238 = ssub.s32 %s16, 2
        // Predicated region
        $region53: #{tpu_custom_call.1} parent=51 // pred_check
          %p1239 = pneg %p134
        $region54: #{tpu_custom_call.1} parent=51 // pred_check_branch
          %1241 = sbr.rel (%p1239) target = $region56
        $region55: #{tpu_custom_call.1} parent=51 // pred_region
          %s1242 = sand.u32 %s119, 1
          %s1243 = scalar_lea.sflag [#allocation3], %s1242
          %s1244 = sand.u32 %s119, 1
          %s1245 = smul.addr %s1244, 32
          %s1246 = scalar_lea.vmem [#allocation2], %s1245
          %1248 = dma.done %s1243, 512
        $region56: #{tpu_custom_call.1} parent=51 // pred_fallthru
          _
        // Predicated region
        $region57: #{tpu_custom_call.1} parent=51 // pred_check
          %p1249 = pneg %p160
        $region58: #{tpu_custom_call.1} parent=51 // pred_check_branch
          %1251 = sbr.rel (%p1249) target = $region60
        $region59: #{tpu_custom_call.1} parent=51 // pred_region
          %p1252 = scmp.lt.s32.totalorder %s22, 1
          %s1253 = scalar_select %p1252, %s22, 1
          %s1254 = smul.addr %s1253, 8
          %s1255 = scalar_lea.vmem %s5, %s1254
        $region60: #{tpu_custom_call.1} parent=51 // pred_fallthru
          _
        // Predicated region
        $region61: #{tpu_custom_call.1} parent=51 // pred_check
          %p1256 = pneg %p186
        $region62: #{tpu_custom_call.1} parent=51 // pred_check_branch
          %1258 = sbr.rel (%p1256) target = $region64
        $region63: #{tpu_custom_call.1} parent=51 // pred_region
          %p1259 = scmp.lt.s32.totalorder %s22, 1
          %s1260 = scalar_select %p1259, %s22, 1
          %s1261 = smul.addr %s1260, 8
          %s1262 = scalar_lea.vmem %s6, %s1261
        $region64: #{tpu_custom_call.1} parent=51 // pred_fallthru
          _
      $region52: #{tpu_custom_call.1} parent=5 // pred_fallthru
        _
    $region6: #{tpu_custom_call.1} parent=1 // loop_footer
      %s20 = sadd.s32 1, %s16
    $region7: #{tpu_custom_call.1} parent=1 // loop_footer_branch
      %15 = sbr.rel target = $region3
    $region8: #{tpu_custom_call.1} parent=1 // loop_exit
      _
    %1263 = vsyncpa [#allocation3], 1
    %s1264 = scalar_lea.sflag [#allocation3], 1
    %1265 = vsyncpa %s1264, 1

</llo_original>
